<compile_context>
chip_gen: v7x
topology: tpu7x:2x2x1
jax: 0.10.0
libtpu: 0.0.40
codegen_flags: <defaults>
</compile_context>

<pallas_src>
import functools

import jax
import jax.numpy as jnp
from jax import lax
from jax.experimental import pallas as pl
from jax.experimental.pallas import tpu as pltpu


_LN_EPS = 1e-6  # the module sets eps=1e-06 for both LayerNorms


def _layernorm(x, gamma, beta):
    # PyTorch nn.LayerNorm: biased variance, eps inside rsqrt.  f32 math.
    mean = jnp.mean(x, axis=-1, keepdims=True)
    var = jnp.mean((x - mean) ** 2, axis=-1, keepdims=True)
    return (x - mean) * lax.rsqrt(var + _LN_EPS) * gamma + beta


def _gelu_exact(x):
    # nn.GELU() default = exact erf GELU (kept exact to match module semantics).
    # TODO(synk): tanh-approx GELU would move this onto the EUP slot if the
    # accuracy budget ever allows.
    return 0.5 * x * (1.0 + lax.erf(x * 0.7071067811865476))


def _matmul_wT(x, w):
    """x @ w.T with PyTorch (out,in) weights: contract the two lane dims, f32 acc."""
    return lax.dot_general(x, w, (((1,), (1,)), ((), ())),
                           preferred_element_type=jnp.float32)


# ----------------------------- Pallas kernel --------------------------------

def attention_block_kernel(
    x_ref,                                  # (1, S, E) f32
    ln1_g_ref, ln1_b_ref,                   # (1, E) f32
    wqkv_ref, bqkv_ref,                     # (3E, E) bf16 (q rows pre-scaled), (1, 3E) f32
    wo_ref, bo_ref,                         # (E, E) bf16, (1, E) f32
    ln2_g_ref, ln2_b_ref,                   # (1, E) f32
    fc1_w_ref, fc1_b_ref,                   # (H, E) bf16, (1, H) f32
    fc2_w_ref, fc2_b_ref,                   # (E, H) bf16, (1, E) f32
    o_ref,                                  # (1, S, E)
    ctx_ref,                                # VMEM scratch (S, E) f32
    *, num_heads,
):
    x = x_ref[0]                            # (S, E) f32, one full sequence
    seq, emb = x.shape
    head_dim = emb // num_heads

    # ---- pre-norm ----
    xn = _layernorm(x, ln1_g_ref[...], ln1_b_ref[...])

    # ---- fused QKV projection: one matmul, N = 3E, bf16 operands / f32 acc ----
    qkv = _matmul_wT(xn.astype(jnp.bfloat16), wqkv_ref[...]) + bqkv_ref[...]

    # ---- per-head attention; heads land in ctx_ref at lane offset h*D ----
    # TODO(synk): at NH=12 switch to lax.fori_loop / head-batched einsum and pad
    # S to a multiple of 128 on the score-matmul N dim.
    for h in range(num_heads):
        lo = h * head_dim
        q = qkv[:, lo:lo + head_dim]                        # (S, D) already scaled
        k = qkv[:, emb + lo:emb + lo + head_dim]            # (S, D)
        v = qkv[:, 2 * emb + lo:2 * emb + lo + head_dim]    # (S, D)

        s = lax.dot_general(q.astype(jnp.bfloat16), k.astype(jnp.bfloat16),
                            (((1,), (1,)), ((), ())),
                            preferred_element_type=jnp.float32)   # (S, S)
        s = s - jnp.max(s, axis=-1, keepdims=True)
        p = jnp.exp(s)
        denom = jnp.sum(p, axis=-1, keepdims=True)                # (S, 1)

        ctx = lax.dot_general(p.astype(jnp.bfloat16), v.astype(jnp.bfloat16),
                              (((1,), (0,)), ((), ())),
                              preferred_element_type=jnp.float32)  # (S, D)
        ctx = ctx * pl.reciprocal(denom, approx=False)             # exact recip
        ctx_ref[:, lo:lo + head_dim] = ctx

    # ---- single full-depth (K = E) output projection ----
    attn = _matmul_wT(ctx_ref[...].astype(jnp.bfloat16), wo_ref[...]) + bo_ref[...]

    # ---- first residual ----
    x1 = x + attn

    # ---- norm + MLP ----
    xn2 = _layernorm(x1, ln2_g_ref[...], ln2_b_ref[...])
    h1 = _matmul_wT(xn2.astype(jnp.bfloat16), fc1_w_ref[...]) + fc1_b_ref[...]
    h1 = _gelu_exact(h1)
    h2 = _matmul_wT(h1.astype(jnp.bfloat16), fc2_w_ref[...]) + fc2_b_ref[...]

    # ---- second residual ----
    o_ref[0, :, :] = (x1 + h2).astype(o_ref.dtype)


# ------------------------------- wrapper -------------------------------------

def _prep_params(params, num_heads, embed_dim):
    """Host-side weight prep: fuse QKV (scale folded into q rows), cast matmul
    weights to bf16, keep biases/LN params f32 and 2-D (1, N)."""
    (ln1_g, ln1_b, in_w, in_b, out_w, out_b,
     ln2_g, ln2_b, fc1_w, fc1_b, fc2_w, fc2_b) = params
    E = embed_dim
    D = E // num_heads
    scale = jnp.float32(1.0 / (D ** 0.5))

    wqkv = jnp.concatenate([in_w[:E] * scale, in_w[E:]], axis=0)   # (3E, E)
    bqkv = jnp.concatenate([in_b[:E] * scale, in_b[E:]], axis=0)   # (3E,)

    bf16, f32 = jnp.bfloat16, jnp.float32
    return (
        ln1_g.reshape(1, E).astype(f32), ln1_b.reshape(1, E).astype(f32),
        wqkv.astype(bf16), bqkv.reshape(1, 3 * E).astype(f32),
        out_w.astype(bf16), out_b.reshape(1, E).astype(f32),
        ln2_g.reshape(1, E).astype(f32), ln2_b.reshape(1, E).astype(f32),
        fc1_w.astype(bf16), fc1_b.reshape(1, -1).astype(f32),
        fc2_w.astype(bf16), fc2_b.reshape(1, -1).astype(f32),
    )


def attention_block(x, params, num_heads):
    B, S, E = x.shape
    assert E % num_heads == 0
    kparams = _prep_params(params, num_heads, E)

    kernel = functools.partial(attention_block_kernel, num_heads=num_heads)

    def _resident(arr):
        # Full-array block with a constant index_map: DMA'd once, stays in VMEM.
        zeros = (0,) * arr.ndim
        return pl.BlockSpec(arr.shape, lambda b: zeros)

    in_specs = ([pl.BlockSpec((1, S, E), lambda b: (b, 0, 0))]
                + [_resident(p) for p in kparams])

    out = pl.pallas_call(
        kernel,
        out_shape=jax.ShapeDtypeStruct((B, S, E), x.dtype),
        grid=(B,),
        in_specs=in_specs,
        out_specs=pl.BlockSpec((1, S, E), lambda b: (b, 0, 0)),
        scratch_shapes=[pltpu.VMEM((S, E), jnp.float32)],
        compiler_params=pltpu.CompilerParams(
            dimension_semantics=("parallel",)),
    )(x, *kparams)
    return out


# ---------------------------- pure-JAX reference -----------------------------

def reference(x, params, num_heads):
    (ln1_g, ln1_b, in_w, in_b, out_w, out_b,
     ln2_g, ln2_b, fc1_w, fc1_b, fc2_w, fc2_b) = params
    B, S, E = x.shape
    D = E // num_heads

    def ln(v, g, b, eps=1e-6):
        m = jnp.mean(v, axis=-1, keepdims=True)
        var = jnp.mean((v - m) ** 2, axis=-1, keepdims=True)
        return (v - m) / jnp.sqrt(var + eps) * g + b

    xn = ln(x, ln1_g, ln1_b)
    qkv = xn @ in_w.T + in_b
    q, k, v = jnp.split(qkv, 3, axis=-1)

    def heads(t):  # (B,S,E) -> (B,H,S,D)
        return t.reshape(B, S, num_heads, D).transpose(0, 2, 1, 3)

    qh, kh, vh = heads(q), heads(k), heads(v)
    s = jnp.einsum("bhqd,bhkd->bhqk", qh, kh) / (D ** 0.5)
    p = jax.nn.softmax(s, axis=-1)
    a = jnp.einsum("bhqk,bhkd->bhqd", p, vh).transpose(0, 2, 1, 3).reshape(B, S, E)
    a = a @ out_w.T + out_b
    x1 = x + a
    xn2 = ln(x1, ln2_g, ln2_b)
    h = jax.nn.gelu(xn2 @ fc1_w.T + fc1_b, approximate=False)
    return x1 + h @ fc2_w.T + fc2_b


# --------------------------------- main ---------------------------------------

if __name__ == "__main__":
    # Small, lane-dense shapes consistent with the module (ViT scaled down):
    # batch=2, seq=16, embed_dim=128, hidden_dim=512, heads=4 (head_dim=32).
    B, S, E, H, NH = 2, 16, 128, 512, 4

    key = jax.random.PRNGKey(0)
    ks = jax.random.split(key, 16)

    def nrm(k, shape, scale=0.02):
        return (scale * jax.random.normal(k, shape)).astype(jnp.float32)

    params = (
        (1.0 + 0.1 * jax.random.normal(ks[9], (E,))).astype(jnp.float32),   # ln1 gamma
        (0.1 * jax.random.normal(ks[10], (E,))).astype(jnp.float32),        # ln1 beta
        nrm(ks[0], (3 * E, E)),                 # in_proj_weight
        nrm(ks[1], (3 * E,)),                   # in_proj_bias
        nrm(ks[2], (E, E)),                     # out_proj.weight
        nrm(ks[3], (E,)),                       # out_proj.bias
        (1.0 + 0.1 * jax.random.normal(ks[11], (E,))).astype(jnp.float32),  # ln2 gamma
        (0.1 * jax.random.normal(ks[12], (E,))).astype(jnp.float32),        # ln2 beta
        nrm(ks[4], (H, E)),                     # MLP fc1.weight
        nrm(ks[5], (H,)),                       # MLP fc1.bias
        nrm(ks[6], (E, H)),                     # MLP fc2.weight
        nrm(ks[7], (E,)),                       # MLP fc2.bias
    )

    x = jax.random.normal(ks[8], (B, S, E), dtype=jnp.float32)

    out = jax.block_until_ready(attention_block(x, params, NH))
    ref = jax.block_until_ready(reference(x, params, NH))

    max_err = jnp.max(jnp.abs(out - ref))
    # Tolerance loosened vs. the pure-f32 reference because matmul operands are
    # bf16 (f32 accumulation); elementwise math stays f32.
    assert jnp.allclose(out, ref, atol=1e-2, rtol=1e-2), f"max abs err {max_err}"

    print("KERNEL_OK")
</pallas_src>

<mosaic_0001>
module attributes {stable_mosaic.version = 11 : i64} {
  func.func @attention_block_kernel(%arg0: i32, %arg1: memref<1x16x128xf32, #tpu.memory_space<vmem>>, %arg2: memref<1x128xf32, #tpu.memory_space<vmem>>, %arg3: memref<1x128xf32, #tpu.memory_space<vmem>>, %arg4: memref<384x128xbf16, #tpu.memory_space<vmem>>, %arg5: memref<1x384xf32, #tpu.memory_space<vmem>>, %arg6: memref<128x128xbf16, #tpu.memory_space<vmem>>, %arg7: memref<1x128xf32, #tpu.memory_space<vmem>>, %arg8: memref<1x128xf32, #tpu.memory_space<vmem>>, %arg9: memref<1x128xf32, #tpu.memory_space<vmem>>, %arg10: memref<512x128xbf16, #tpu.memory_space<vmem>>, %arg11: memref<1x512xf32, #tpu.memory_space<vmem>>, %arg12: memref<128x512xbf16, #tpu.memory_space<vmem>>, %arg13: memref<1x128xf32, #tpu.memory_space<vmem>>, %arg14: memref<1x16x128xf32, #tpu.memory_space<vmem>>, %arg15: memref<16x128xf32, #tpu.memory_space<vmem>>) attributes {dimension_semantics = [#tpu.dimension_semantics<parallel>], iteration_bounds = array<i64: 2>, scalar_prefetch = 0 : i64, scratch_operands = 1 : i64, tpu.core_type = #tpu.core_type<tc>, window_params = [{transform_indices = @transform_0, window_bounds = array<i64: 1, 16, 128>}, {pipeline_mode = #tpu.pipeline_mode<synchronous>, transform_indices = @transform_1, window_bounds = array<i64: 1, 128>}, {pipeline_mode = #tpu.pipeline_mode<synchronous>, transform_indices = @transform_2, window_bounds = array<i64: 1, 128>}, {pipeline_mode = #tpu.pipeline_mode<synchronous>, transform_indices = @transform_3, window_bounds = array<i64: 384, 128>}, {pipeline_mode = #tpu.pipeline_mode<synchronous>, transform_indices = @transform_4, window_bounds = array<i64: 1, 384>}, {pipeline_mode = #tpu.pipeline_mode<synchronous>, transform_indices = @transform_5, window_bounds = array<i64: 128, 128>}, {pipeline_mode = #tpu.pipeline_mode<synchronous>, transform_indices = @transform_6, window_bounds = array<i64: 1, 128>}, {pipeline_mode = #tpu.pipeline_mode<synchronous>, transform_indices = @transform_7, window_bounds = array<i64: 1, 128>}, {pipeline_mode = #tpu.pipeline_mode<synchronous>, transform_indices = @transform_8, window_bounds = array<i64: 1, 128>}, {pipeline_mode = #tpu.pipeline_mode<synchronous>, transform_indices = @transform_9, window_bounds = array<i64: 512, 128>}, {pipeline_mode = #tpu.pipeline_mode<synchronous>, transform_indices = @transform_10, window_bounds = array<i64: 1, 512>}, {pipeline_mode = #tpu.pipeline_mode<synchronous>, transform_indices = @transform_11, window_bounds = array<i64: 128, 512>}, {pipeline_mode = #tpu.pipeline_mode<synchronous>, transform_indices = @transform_12, window_bounds = array<i64: 1, 128>}, {transform_indices = @transform_13, window_bounds = array<i64: 1, 16, 128>}]} {
    %c0 = arith.constant 0 : index
    %c0_0 = arith.constant 0 : index
    %c0_1 = arith.constant 0 : index
    %0 = vector.load %arg1[%c0, %c0_0, %c0_1] : memref<1x16x128xf32, #tpu.memory_space<vmem>>, vector<1x16x128xf32>
    %1 = vector.shape_cast %0 : vector<1x16x128xf32> to vector<16x128xf32>
    %c0_2 = arith.constant 0 : index
    %c0_3 = arith.constant 0 : index
    %2 = vector.load %arg2[%c0_2, %c0_3] : memref<1x128xf32, #tpu.memory_space<vmem>>, vector<1x128xf32>
    %c0_4 = arith.constant 0 : index
    %c0_5 = arith.constant 0 : index
    %3 = vector.load %arg3[%c0_4, %c0_5] : memref<1x128xf32, #tpu.memory_space<vmem>>, vector<1x128xf32>
    %cst = arith.constant dense<0.000000e+00> : vector<16xf32>
    %4 = vector.multi_reduction <add>, %1, %cst [1] : vector<16x128xf32> to vector<16xf32>
    %5 = vector.shape_cast %4 : vector<16xf32> to vector<16x1xf32>
    %cst_6 = arith.constant 1.280000e+02 : f32
    %6 = vector.broadcast %cst_6 : f32 to vector<16x1xf32>
    %7 = arith.divf %5, %6 : vector<16x1xf32>
    %8 = vector.broadcast %7 : vector<16x1xf32> to vector<16x128xf32>
    %9 = arith.subf %1, %8 : vector<16x128xf32>
    %10 = arith.mulf %9, %9 : vector<16x128xf32>
    %cst_7 = arith.constant dense<0.000000e+00> : vector<16xf32>
    %11 = vector.multi_reduction <add>, %10, %cst_7 [1] : vector<16x128xf32> to vector<16xf32>
    %12 = vector.shape_cast %11 : vector<16xf32> to vector<16x1xf32>
    %cst_8 = arith.constant 1.280000e+02 : f32
    %13 = vector.broadcast %cst_8 : f32 to vector<16x1xf32>
    %14 = arith.divf %12, %13 : vector<16x1xf32>
    %15 = vector.broadcast %7 : vector<16x1xf32> to vector<16x128xf32>
    %16 = arith.subf %1, %15 : vector<16x128xf32>
    %cst_9 = arith.constant 9.99999997E-7 : f32
    %17 = vector.broadcast %cst_9 : f32 to vector<16x1xf32>
    %18 = arith.addf %14, %17 : vector<16x1xf32>
    %19 = math.rsqrt %18 : vector<16x1xf32>
    %20 = vector.broadcast %19 : vector<16x1xf32> to vector<16x128xf32>
    %21 = arith.mulf %16, %20 : vector<16x128xf32>
    %22 = vector.broadcast %2 : vector<1x128xf32> to vector<16x128xf32>
    %23 = arith.mulf %21, %22 : vector<16x128xf32>
    %24 = vector.broadcast %3 : vector<1x128xf32> to vector<16x128xf32>
    %25 = arith.addf %23, %24 : vector<16x128xf32>
    %26 = arith.truncf %25 : vector<16x128xf32> to vector<16x128xbf16>
    %c0_10 = arith.constant 0 : index
    %c0_11 = arith.constant 0 : index
    %27 = vector.load %arg4[%c0_10, %c0_11] : memref<384x128xbf16, #tpu.memory_space<vmem>>, vector<384x128xbf16>
    %cst_12 = arith.constant dense<0.000000e+00> : vector<16x384xf32>
    %28 = tpu.matmul %26, %27, %cst_12 {dimension_numbers = #tpu.dot_dimension_numbers<[1], [1], [0], [0], [0, 0, 1, 0], [], []>} : vector<16x128xbf16>, vector<384x128xbf16>, vector<16x384xf32> -> vector<16x384xf32>
    %c0_13 = arith.constant 0 : index
    %c0_14 = arith.constant 0 : index
    %29 = vector.load %arg5[%c0_13, %c0_14] : memref<1x384xf32, #tpu.memory_space<vmem>>, vector<1x384xf32>
    %30 = vector.broadcast %29 : vector<1x384xf32> to vector<16x384xf32>
    %31 = arith.addf %28, %30 : vector<16x384xf32>
    %32 = vector.extract_strided_slice %31 {offsets = [0, 0], sizes = [16, 32], strides = [1, 1]} : vector<16x384xf32> to vector<16x32xf32>
    %33 = vector.extract_strided_slice %31 {offsets = [0, 128], sizes = [16, 32], strides = [1, 1]} : vector<16x384xf32> to vector<16x32xf32>
    %34 = vector.extract_strided_slice %31 {offsets = [0, 256], sizes = [16, 32], strides = [1, 1]} : vector<16x384xf32> to vector<16x32xf32>
    %35 = arith.truncf %32 : vector<16x32xf32> to vector<16x32xbf16>
    %36 = arith.truncf %33 : vector<16x32xf32> to vector<16x32xbf16>
    %cst_15 = arith.constant dense<0.000000e+00> : vector<16x16xf32>
    %37 = tpu.matmul %35, %36, %cst_15 {dimension_numbers = #tpu.dot_dimension_numbers<[1], [1], [0], [0], [0, 0, 1, 0], [], []>} : vector<16x32xbf16>, vector<16x32xbf16>, vector<16x16xf32> -> vector<16x16xf32>
    %cst_16 = arith.constant dense<0xFF800000> : vector<16xf32>
    %38 = vector.multi_reduction <maximumf>, %37, %cst_16 [1] : vector<16x16xf32> to vector<16xf32>
    %39 = vector.shape_cast %38 : vector<16xf32> to vector<16x1xf32>
    %40 = vector.broadcast %39 : vector<16x1xf32> to vector<16x16xf32>
    %41 = arith.subf %37, %40 : vector<16x16xf32>
    %42 = math.exp %41 : vector<16x16xf32>
    %cst_17 = arith.constant dense<0.000000e+00> : vector<16xf32>
    %43 = vector.multi_reduction <add>, %42, %cst_17 [1] : vector<16x16xf32> to vector<16xf32>
    %44 = vector.shape_cast %43 : vector<16xf32> to vector<16x1xf32>
    %45 = arith.truncf %42 : vector<16x16xf32> to vector<16x16xbf16>
    %46 = arith.truncf %34 : vector<16x32xf32> to vector<16x32xbf16>
    %cst_18 = arith.constant dense<0.000000e+00> : vector<16x32xf32>
    %47 = tpu.matmul %45, %46, %cst_18 {dimension_numbers = #tpu.dot_dimension_numbers<[1], [0], [0], [1], [0, 0, 1, 1], [], []>} : vector<16x16xbf16>, vector<16x32xbf16>, vector<16x32xf32> -> vector<16x32xf32>
    %48 = tpu.reciprocal %44 : vector<16x1xf32> -> vector<16x1xf32>
    %49 = vector.broadcast %48 : vector<16x1xf32> to vector<16x32xf32>
    %50 = arith.mulf %47, %49 : vector<16x32xf32>
    %c0_19 = arith.constant 0 : index
    %c0_20 = arith.constant 0 : index
    %51 = vector.load %arg15[%c0_19, %c0_20] : memref<16x128xf32, #tpu.memory_space<vmem>>, vector<16x32xf32>
    tpu.vector_store %arg15[%c0_19, %c0_20], %50 {strides = array<i32>} : memref<16x128xf32, #tpu.memory_space<vmem>>, vector<16x32xf32>,
    %52 = vector.extract_strided_slice %31 {offsets = [0, 32], sizes = [16, 32], strides = [1, 1]} : vector<16x384xf32> to vector<16x32xf32>
    %53 = vector.extract_strided_slice %31 {offsets = [0, 160], sizes = [16, 32], strides = [1, 1]} : vector<16x384xf32> to vector<16x32xf32>
    %54 = vector.extract_strided_slice %31 {offsets = [0, 288], sizes = [16, 32], strides = [1, 1]} : vector<16x384xf32> to vector<16x32xf32>
    %55 = arith.truncf %52 : vector<16x32xf32> to vector<16x32xbf16>
    %56 = arith.truncf %53 : vector<16x32xf32> to vector<16x32xbf16>
    %cst_21 = arith.constant dense<0.000000e+00> : vector<16x16xf32>
    %57 = tpu.matmul %55, %56, %cst_21 {dimension_numbers = #tpu.dot_dimension_numbers<[1], [1], [0], [0], [0, 0, 1, 0], [], []>} : vector<16x32xbf16>, vector<16x32xbf16>, vector<16x16xf32> -> vector<16x16xf32>
    %cst_22 = arith.constant dense<0xFF800000> : vector<16xf32>
    %58 = vector.multi_reduction <maximumf>, %57, %cst_22 [1] : vector<16x16xf32> to vector<16xf32>
    %59 = vector.shape_cast %58 : vector<16xf32> to vector<16x1xf32>
    %60 = vector.broadcast %59 : vector<16x1xf32> to vector<16x16xf32>
    %61 = arith.subf %57, %60 : vector<16x16xf32>
    %62 = math.exp %61 : vector<16x16xf32>
    %cst_23 = arith.constant dense<0.000000e+00> : vector<16xf32>
    %63 = vector.multi_reduction <add>, %62, %cst_23 [1] : vector<16x16xf32> to vector<16xf32>
    %64 = vector.shape_cast %63 : vector<16xf32> to vector<16x1xf32>
    %65 = arith.truncf %62 : vector<16x16xf32> to vector<16x16xbf16>
    %66 = arith.truncf %54 : vector<16x32xf32> to vector<16x32xbf16>
    %cst_24 = arith.constant dense<0.000000e+00> : vector<16x32xf32>
    %67 = tpu.matmul %65, %66, %cst_24 {dimension_numbers = #tpu.dot_dimension_numbers<[1], [0], [0], [1], [0, 0, 1, 1], [], []>} : vector<16x16xbf16>, vector<16x32xbf16>, vector<16x32xf32> -> vector<16x32xf32>
    %68 = tpu.reciprocal %64 : vector<16x1xf32> -> vector<16x1xf32>
    %69 = vector.broadcast %68 : vector<16x1xf32> to vector<16x32xf32>
    %70 = arith.mulf %67, %69 : vector<16x32xf32>
    %c0_25 = arith.constant 0 : index
    %c32 = arith.constant 32 : index
    %71 = vector.load %arg15[%c0_25, %c32] : memref<16x128xf32, #tpu.memory_space<vmem>>, vector<16x32xf32>
    tpu.vector_store %arg15[%c0_25, %c32], %70 {strides = array<i32>} : memref<16x128xf32, #tpu.memory_space<vmem>>, vector<16x32xf32>,
    %72 = vector.extract_strided_slice %31 {offsets = [0, 64], sizes = [16, 32], strides = [1, 1]} : vector<16x384xf32> to vector<16x32xf32>
    %73 = vector.extract_strided_slice %31 {offsets = [0, 192], sizes = [16, 32], strides = [1, 1]} : vector<16x384xf32> to vector<16x32xf32>
    %74 = vector.extract_strided_slice %31 {offsets = [0, 320], sizes = [16, 32], strides = [1, 1]} : vector<16x384xf32> to vector<16x32xf32>
    %75 = arith.truncf %72 : vector<16x32xf32> to vector<16x32xbf16>
    %76 = arith.truncf %73 : vector<16x32xf32> to vector<16x32xbf16>
    %cst_26 = arith.constant dense<0.000000e+00> : vector<16x16xf32>
    %77 = tpu.matmul %75, %76, %cst_26 {dimension_numbers = #tpu.dot_dimension_numbers<[1], [1], [0], [0], [0, 0, 1, 0], [], []>} : vector<16x32xbf16>, vector<16x32xbf16>, vector<16x16xf32> -> vector<16x16xf32>
    %cst_27 = arith.constant dense<0xFF800000> : vector<16xf32>
    %78 = vector.multi_reduction <maximumf>, %77, %cst_27 [1] : vector<16x16xf32> to vector<16xf32>
    %79 = vector.shape_cast %78 : vector<16xf32> to vector<16x1xf32>
    %80 = vector.broadcast %79 : vector<16x1xf32> to vector<16x16xf32>
    %81 = arith.subf %77, %80 : vector<16x16xf32>
    %82 = math.exp %81 : vector<16x16xf32>
    %cst_28 = arith.constant dense<0.000000e+00> : vector<16xf32>
    %83 = vector.multi_reduction <add>, %82, %cst_28 [1] : vector<16x16xf32> to vector<16xf32>
    %84 = vector.shape_cast %83 : vector<16xf32> to vector<16x1xf32>
    %85 = arith.truncf %82 : vector<16x16xf32> to vector<16x16xbf16>
    %86 = arith.truncf %74 : vector<16x32xf32> to vector<16x32xbf16>
    %cst_29 = arith.constant dense<0.000000e+00> : vector<16x32xf32>
    %87 = tpu.matmul %85, %86, %cst_29 {dimension_numbers = #tpu.dot_dimension_numbers<[1], [0], [0], [1], [0, 0, 1, 1], [], []>} : vector<16x16xbf16>, vector<16x32xbf16>, vector<16x32xf32> -> vector<16x32xf32>
    %88 = tpu.reciprocal %84 : vector<16x1xf32> -> vector<16x1xf32>
    %89 = vector.broadcast %88 : vector<16x1xf32> to vector<16x32xf32>
    %90 = arith.mulf %87, %89 : vector<16x32xf32>
    %c0_30 = arith.constant 0 : index
    %c64 = arith.constant 64 : index
    %91 = vector.load %arg15[%c0_30, %c64] : memref<16x128xf32, #tpu.memory_space<vmem>>, vector<16x32xf32>
    tpu.vector_store %arg15[%c0_30, %c64], %90 {strides = array<i32>} : memref<16x128xf32, #tpu.memory_space<vmem>>, vector<16x32xf32>,
    %92 = vector.extract_strided_slice %31 {offsets = [0, 96], sizes = [16, 32], strides = [1, 1]} : vector<16x384xf32> to vector<16x32xf32>
    %93 = vector.extract_strided_slice %31 {offsets = [0, 224], sizes = [16, 32], strides = [1, 1]} : vector<16x384xf32> to vector<16x32xf32>
    %94 = vector.extract_strided_slice %31 {offsets = [0, 352], sizes = [16, 32], strides = [1, 1]} : vector<16x384xf32> to vector<16x32xf32>
    %95 = arith.truncf %92 : vector<16x32xf32> to vector<16x32xbf16>
    %96 = arith.truncf %93 : vector<16x32xf32> to vector<16x32xbf16>
    %cst_31 = arith.constant dense<0.000000e+00> : vector<16x16xf32>
    %97 = tpu.matmul %95, %96, %cst_31 {dimension_numbers = #tpu.dot_dimension_numbers<[1], [1], [0], [0], [0, 0, 1, 0], [], []>} : vector<16x32xbf16>, vector<16x32xbf16>, vector<16x16xf32> -> vector<16x16xf32>
    %cst_32 = arith.constant dense<0xFF800000> : vector<16xf32>
    %98 = vector.multi_reduction <maximumf>, %97, %cst_32 [1] : vector<16x16xf32> to vector<16xf32>
    %99 = vector.shape_cast %98 : vector<16xf32> to vector<16x1xf32>
    %100 = vector.broadcast %99 : vector<16x1xf32> to vector<16x16xf32>
    %101 = arith.subf %97, %100 : vector<16x16xf32>
    %102 = math.exp %101 : vector<16x16xf32>
    %cst_33 = arith.constant dense<0.000000e+00> : vector<16xf32>
    %103 = vector.multi_reduction <add>, %102, %cst_33 [1] : vector<16x16xf32> to vector<16xf32>
    %104 = vector.shape_cast %103 : vector<16xf32> to vector<16x1xf32>
    %105 = arith.truncf %102 : vector<16x16xf32> to vector<16x16xbf16>
    %106 = arith.truncf %94 : vector<16x32xf32> to vector<16x32xbf16>
    %cst_34 = arith.constant dense<0.000000e+00> : vector<16x32xf32>
    %107 = tpu.matmul %105, %106, %cst_34 {dimension_numbers = #tpu.dot_dimension_numbers<[1], [0], [0], [1], [0, 0, 1, 1], [], []>} : vector<16x16xbf16>, vector<16x32xbf16>, vector<16x32xf32> -> vector<16x32xf32>
    %108 = tpu.reciprocal %104 : vector<16x1xf32> -> vector<16x1xf32>
    %109 = vector.broadcast %108 : vector<16x1xf32> to vector<16x32xf32>
    %110 = arith.mulf %107, %109 : vector<16x32xf32>
    %c0_35 = arith.constant 0 : index
    %c96 = arith.constant 96 : index
    %111 = vector.load %arg15[%c0_35, %c96] : memref<16x128xf32, #tpu.memory_space<vmem>>, vector<16x32xf32>
    tpu.vector_store %arg15[%c0_35, %c96], %110 {strides = array<i32>} : memref<16x128xf32, #tpu.memory_space<vmem>>, vector<16x32xf32>,
    %c0_36 = arith.constant 0 : index
    %c0_37 = arith.constant 0 : index
    %112 = vector.load %arg15[%c0_36, %c0_37] : memref<16x128xf32, #tpu.memory_space<vmem>>, vector<16x128xf32>
    %113 = arith.truncf %112 : vector<16x128xf32> to vector<16x128xbf16>
    %c0_38 = arith.constant 0 : index
    %c0_39 = arith.constant 0 : index
    %114 = vector.load %arg6[%c0_38, %c0_39] : memref<128x128xbf16, #tpu.memory_space<vmem>>, vector<128x128xbf16>
    %cst_40 = arith.constant dense<0.000000e+00> : vector<16x128xf32>
    %115 = tpu.matmul %113, %114, %cst_40 {dimension_numbers = #tpu.dot_dimension_numbers<[1], [1], [0], [0], [0, 0, 1, 0], [], []>} : vector<16x128xbf16>, vector<128x128xbf16>, vector<16x128xf32> -> vector<16x128xf32>
    %c0_41 = arith.constant 0 : index
    %c0_42 = arith.constant 0 : index
    %116 = vector.load %arg7[%c0_41, %c0_42] : memref<1x128xf32, #tpu.memory_space<vmem>>, vector<1x128xf32>
    %117 = vector.broadcast %116 : vector<1x128xf32> to vector<16x128xf32>
    %118 = arith.addf %115, %117 : vector<16x128xf32>
    %119 = arith.addf %1, %118 : vector<16x128xf32>
    %c0_43 = arith.constant 0 : index
    %c0_44 = arith.constant 0 : index
    %120 = vector.load %arg8[%c0_43, %c0_44] : memref<1x128xf32, #tpu.memory_space<vmem>>, vector<1x128xf32>
    %c0_45 = arith.constant 0 : index
    %c0_46 = arith.constant 0 : index
    %121 = vector.load %arg9[%c0_45, %c0_46] : memref<1x128xf32, #tpu.memory_space<vmem>>, vector<1x128xf32>
    %cst_47 = arith.constant dense<0.000000e+00> : vector<16xf32>
    %122 = vector.multi_reduction <add>, %119, %cst_47 [1] : vector<16x128xf32> to vector<16xf32>
    %123 = vector.shape_cast %122 : vector<16xf32> to vector<16x1xf32>
    %cst_48 = arith.constant 1.280000e+02 : f32
    %124 = vector.broadcast %cst_48 : f32 to vector<16x1xf32>
    %125 = arith.divf %123, %124 : vector<16x1xf32>
    %126 = vector.broadcast %125 : vector<16x1xf32> to vector<16x128xf32>
    %127 = arith.subf %119, %126 : vector<16x128xf32>
    %128 = arith.mulf %127, %127 : vector<16x128xf32>
    %cst_49 = arith.constant dense<0.000000e+00> : vector<16xf32>
    %129 = vector.multi_reduction <add>, %128, %cst_49 [1] : vector<16x128xf32> to vector<16xf32>
    %130 = vector.shape_cast %129 : vector<16xf32> to vector<16x1xf32>
    %cst_50 = arith.constant 1.280000e+02 : f32
    %131 = vector.broadcast %cst_50 : f32 to vector<16x1xf32>
    %132 = arith.divf %130, %131 : vector<16x1xf32>
    %133 = vector.broadcast %125 : vector<16x1xf32> to vector<16x128xf32>
    %134 = arith.subf %119, %133 : vector<16x128xf32>
    %cst_51 = arith.constant 9.99999997E-7 : f32
    %135 = vector.broadcast %cst_51 : f32 to vector<16x1xf32>
    %136 = arith.addf %132, %135 : vector<16x1xf32>
    %137 = math.rsqrt %136 : vector<16x1xf32>
    %138 = vector.broadcast %137 : vector<16x1xf32> to vector<16x128xf32>
    %139 = arith.mulf %134, %138 : vector<16x128xf32>
    %140 = vector.broadcast %120 : vector<1x128xf32> to vector<16x128xf32>
    %141 = arith.mulf %139, %140 : vector<16x128xf32>
    %142 = vector.broadcast %121 : vector<1x128xf32> to vector<16x128xf32>
    %143 = arith.addf %141, %142 : vector<16x128xf32>
    %144 = arith.truncf %143 : vector<16x128xf32> to vector<16x128xbf16>
    %c0_52 = arith.constant 0 : index
    %c0_53 = arith.constant 0 : index
    %145 = vector.load %arg10[%c0_52, %c0_53] : memref<512x128xbf16, #tpu.memory_space<vmem>>, vector<512x128xbf16>
    %cst_54 = arith.constant dense<0.000000e+00> : vector<16x512xf32>
    %146 = tpu.matmul %144, %145, %cst_54 {dimension_numbers = #tpu.dot_dimension_numbers<[1], [1], [0], [0], [0, 0, 1, 0], [], []>} : vector<16x128xbf16>, vector<512x128xbf16>, vector<16x512xf32> -> vector<16x512xf32>
    %c0_55 = arith.constant 0 : index
    %c0_56 = arith.constant 0 : index
    %147 = vector.load %arg11[%c0_55, %c0_56] : memref<1x512xf32, #tpu.memory_space<vmem>>, vector<1x512xf32>
    %148 = vector.broadcast %147 : vector<1x512xf32> to vector<16x512xf32>
    %149 = arith.addf %146, %148 : vector<16x512xf32>
    %cst_57 = arith.constant 5.000000e-01 : f32
    %150 = vector.broadcast %cst_57 : f32 to vector<16x512xf32>
    %151 = arith.mulf %150, %149 : vector<16x512xf32>
    %cst_58 = arith.constant 0.707106769 : f32
    %152 = vector.broadcast %cst_58 : f32 to vector<16x512xf32>
    %153 = arith.mulf %149, %152 : vector<16x512xf32>
    %154 = math.erf %153 : vector<16x512xf32>
    %cst_59 = arith.constant 1.000000e+00 : f32
    %155 = vector.broadcast %cst_59 : f32 to vector<16x512xf32>
    %156 = arith.addf %155, %154 : vector<16x512xf32>
    %157 = arith.mulf %151, %156 : vector<16x512xf32>
    %158 = arith.truncf %157 : vector<16x512xf32> to vector<16x512xbf16>
    %c0_60 = arith.constant 0 : index
    %c0_61 = arith.constant 0 : index
    %159 = vector.load %arg12[%c0_60, %c0_61] : memref<128x512xbf16, #tpu.memory_space<vmem>>, vector<128x512xbf16>
    %cst_62 = arith.constant dense<0.000000e+00> : vector<16x128xf32>
    %160 = tpu.matmul %158, %159, %cst_62 {dimension_numbers = #tpu.dot_dimension_numbers<[1], [1], [0], [0], [0, 0, 1, 0], [], []>} : vector<16x512xbf16>, vector<128x512xbf16>, vector<16x128xf32> -> vector<16x128xf32>
    %c0_63 = arith.constant 0 : index
    %c0_64 = arith.constant 0 : index
    %161 = vector.load %arg13[%c0_63, %c0_64] : memref<1x128xf32, #tpu.memory_space<vmem>>, vector<1x128xf32>
    %162 = vector.broadcast %161 : vector<1x128xf32> to vector<16x128xf32>
    %163 = arith.addf %160, %162 : vector<16x128xf32>
    %164 = arith.addf %119, %163 : vector<16x128xf32>
    %c0_65 = arith.constant 0 : index
    %c0_66 = arith.constant 0 : index
    %c0_67 = arith.constant 0 : index
    %165 = vector.load %arg14[%c0_65, %c0_66, %c0_67] : memref<1x16x128xf32, #tpu.memory_space<vmem>>, vector<1x16x128xf32>
    %166 = vector.shape_cast %165 : vector<1x16x128xf32> to vector<16x128xf32>
    %167 = vector.shape_cast %164 : vector<16x128xf32> to vector<1x16x128xf32>
    tpu.vector_store %arg14[%c0_65, %c0_66, %c0_67], %167 {strides = array<i32>} : memref<1x16x128xf32, #tpu.memory_space<vmem>>, vector<1x16x128xf32>,
    return
  }
  func.func @transform_0(%arg0: i32) -> (i32, i32, i32) {
    %c0_i32 = arith.constant 0 : i32
    %c0_i32_0 = arith.constant 0 : i32
    %c0_i32_1 = arith.constant 0 : i32
    return %arg0, %c0_i32, %c0_i32_0 : i32, i32, i32
  }
  func.func @transform_1(%arg0: i32) -> (i32, i32) {
    %c0_i32 = arith.constant 0 : i32
    %c0_i32_0 = arith.constant 0 : i32
    %c0_i32_1 = arith.constant 0 : i32
    return %c0_i32, %c0_i32_0 : i32, i32
  }
  func.func @transform_2(%arg0: i32) -> (i32, i32) {
    %c0_i32 = arith.constant 0 : i32
    %c0_i32_0 = arith.constant 0 : i32
    %c0_i32_1 = arith.constant 0 : i32
    return %c0_i32, %c0_i32_0 : i32, i32
  }
  func.func @transform_3(%arg0: i32) -> (i32, i32) {
    %c0_i32 = arith.constant 0 : i32
    %c0_i32_0 = arith.constant 0 : i32
    %c0_i32_1 = arith.constant 0 : i32
    return %c0_i32, %c0_i32_0 : i32, i32
  }
  func.func @transform_4(%arg0: i32) -> (i32, i32) {
    %c0_i32 = arith.constant 0 : i32
    %c0_i32_0 = arith.constant 0 : i32
    %c0_i32_1 = arith.constant 0 : i32
    return %c0_i32, %c0_i32_0 : i32, i32
  }
  func.func @transform_5(%arg0: i32) -> (i32, i32) {
    %c0_i32 = arith.constant 0 : i32
    %c0_i32_0 = arith.constant 0 : i32
    %c0_i32_1 = arith.constant 0 : i32
    return %c0_i32, %c0_i32_0 : i32, i32
  }
  func.func @transform_6(%arg0: i32) -> (i32, i32) {
    %c0_i32 = arith.constant 0 : i32
    %c0_i32_0 = arith.constant 0 : i32
    %c0_i32_1 = arith.constant 0 : i32
    return %c0_i32, %c0_i32_0 : i32, i32
  }
  func.func @transform_7(%arg0: i32) -> (i32, i32) {
    %c0_i32 = arith.constant 0 : i32
    %c0_i32_0 = arith.constant 0 : i32
    %c0_i32_1 = arith.constant 0 : i32
    return %c0_i32, %c0_i32_0 : i32, i32
  }
  func.func @transform_8(%arg0: i32) -> (i32, i32) {
    %c0_i32 = arith.constant 0 : i32
    %c0_i32_0 = arith.constant 0 : i32
    %c0_i32_1 = arith.constant 0 : i32
    return %c0_i32, %c0_i32_0 : i32, i32
  }
  func.func @transform_9(%arg0: i32) -> (i32, i32) {
    %c0_i32 = arith.constant 0 : i32
    %c0_i32_0 = arith.constant 0 : i32
    %c0_i32_1 = arith.constant 0 : i32
    return %c0_i32, %c0_i32_0 : i32, i32
  }
  func.func @transform_10(%arg0: i32) -> (i32, i32) {
    %c0_i32 = arith.constant 0 : i32
    %c0_i32_0 = arith.constant 0 : i32
    %c0_i32_1 = arith.constant 0 : i32
    return %c0_i32, %c0_i32_0 : i32, i32
  }
  func.func @transform_11(%arg0: i32) -> (i32, i32) {
    %c0_i32 = arith.constant 0 : i32
    %c0_i32_0 = arith.constant 0 : i32
    %c0_i32_1 = arith.constant 0 : i32
    return %c0_i32, %c0_i32_0 : i32, i32
  }
  func.func @transform_12(%arg0: i32) -> (i32, i32) {
    %c0_i32 = arith.constant 0 : i32
    %c0_i32_0 = arith.constant 0 : i32
    %c0_i32_1 = arith.constant 0 : i32
    return %c0_i32, %c0_i32_0 : i32, i32
  }
  func.func @transform_13(%arg0: i32) -> (i32, i32, i32) {
    %c0_i32 = arith.constant 0 : i32
    %c0_i32_0 = arith.constant 0 : i32
    %c0_i32_1 = arith.constant 0 : i32
    return %arg0, %c0_i32, %c0_i32_0 : i32, i32, i32
  }
}

</mosaic_0001>

<llo_original>
// kernel: tpu_custom_call.1
$region0: #{tpu_custom_call.1}
  #allocation0 [shape = 'u32[]', space=smem, size = 0x4, offset = 0x4, fixed_abs, tag = 'smem constant byte address 0x4 - core index']
  #allocation1 [shape = 'u32[144,128]{1,0:T(1,128)}', space=vmem, size = 0x12000, scoped, tag = 'internal scratch']
  #allocation2 [shape = 'f32[16,128]{1,0:T(8,128)}', space=vmem, size = 0x2000, scoped, tag = 'scratch operand']
  %s0 = inlined_call_operand.hbm [shape: f32[2,16,128], index: 0, kind: input, shape index: {}]
  %s1 = inlined_call_operand.hbm [shape: f32[1,128], index: 1, kind: input, shape index: {}]
  %s2 = inlined_call_operand.hbm [shape: f32[1,128], index: 2, kind: input, shape index: {}]
  %s3 = inlined_call_operand.hbm [shape: bf16[384,128], index: 3, kind: input, shape index: {}]
  %s4 = inlined_call_operand.vmem [shape: f32[1,384], index: 4, kind: input, shape index: {}]
  %s5 = inlined_call_operand.hbm [shape: bf16[128,128], index: 5, kind: input, shape index: {}]
  %s6 = inlined_call_operand.vmem [shape: f32[1,128], index: 6, kind: input, shape index: {}]
  %s7 = inlined_call_operand.vmem [shape: f32[1,128], index: 7, kind: input, shape index: {}]
  %s8 = inlined_call_operand.vmem [shape: f32[1,128], index: 8, kind: input, shape index: {}]
  %s9 = inlined_call_operand.hbm [shape: bf16[512,128], index: 9, kind: input, shape index: {}]
  %s10 = inlined_call_operand.vmem [shape: f32[1,512], index: 10, kind: input, shape index: {}]
  %s11 = inlined_call_operand.hbm [shape: bf16[128,512], index: 11, kind: input, shape index: {}]
  %s12 = inlined_call_operand.vmem [shape: f32[1,128], index: 12, kind: input, shape index: {}]
  %s13 = inlined_call_operand.hbm [shape: f32[2,16,128], index: 13, kind: output, shape index: {}]
  %s14 = sld [smem:[#allocation0]]
  $region113: #{tpu_custom_call.1} parent=0
    _
  %s16 = ssub.s32 1, %s14
  %s17 = scalar_select 0, %s16, %s14
  $region1: #{tpu_custom_call.1} parent=0
    #allocation3 [shape = 'u8[16384]{0}', space=vmem, size = 0x4000, scoped, tag = 'input window, operand 0']
    #allocation4 [shape = 's32[2]{0}', space=sflag, size = 0x8, scoped, tag = 'scoped memory for tpu_custom_call.1']
    #allocation5 [shape = 's32[2]{0}', space=sflag, size = 0x8, scoped, tag = 'scoped memory for tpu_custom_call.1']
    #allocation6 [shape = 'u8[512]{0}', space=vmem, size = 0x400, scoped, tag = 'input window, operand 1, single buffered']
    #allocation7 [shape = 's32[1]{0}', space=sflag, size = 0x4, scoped, tag = 'scoped memory for tpu_custom_call.1']
    #allocation8 [shape = 'u8[512]{0}', space=vmem, size = 0x400, scoped, tag = 'input window, operand 2, single buffered']
    #allocation9 [shape = 'u8[98304]{0}', space=vmem, size = 0x18000, scoped, tag = 'input window, operand 3, single buffered']
    #allocation10 [shape = 's32[1]{0}', space=sflag, size = 0x4, scoped, tag = 'scoped memory for tpu_custom_call.1']
    #allocation11 [shape = 'u8[32768]{0}', space=vmem, size = 0x8000, scoped, tag = 'input window, operand 5, single buffered']
    #allocation12 [shape = 'u8[131072]{0}', space=vmem, size = 0x20000, scoped, tag = 'input window, operand 9, single buffered']
    #allocation13 [shape = 's32[1]{0}', space=sflag, size = 0x4, scoped, tag = 'scoped memory for tpu_custom_call.1']
    #allocation14 [shape = 'u8[131072]{0}', space=vmem, size = 0x20000, scoped, tag = 'input window, operand 11, single buffered']
    #allocation15 [shape = 'u8[16384]{0}', space=vmem, size = 0x4000, scoped, tag = 'output window, operand 0']
    %18 = vsyncpa [#allocation4], 0
    %s19 = scalar_lea.sflag [#allocation4], 1
    %20 = vsyncpa %s19, 0
    %21 = vsyncpa [#allocation7], 0
    %22 = vsyncpa [#allocation10], 0
    %23 = vsyncpa [#allocation13], 0
    %24 = vsyncpa [#allocation5], 0
    %s25 = scalar_lea.sflag [#allocation5], 1
    %26 = vsyncpa %s25, 0
    loop: start=0, step=1, limit=4
    $region2: #{tpu_custom_call.1} parent=1 // loop_pre_header
      _
    $region3: #{tpu_custom_call.1} parent=1 // loop_header
      %s28 = sphi 0, %s32
      %p29 = scmp.ge.s32.totalorder %s28, 4
      %s38 = sphi 0, %s40
      %s41 = sphi 0, %s38
      %s42 = sphi 0, %s41
      %s58 = sphi 0, %s42
      %s62 = sphi 0, %s62
      %s64 = sphi 0, %s62
      %s65 = sphi 0, %s64
      %s79 = sphi 0, %s65
      %s83 = sphi 0, %s83
      %s85 = sphi 0, %s83
      %s86 = sphi 0, %s85
      %s100 = sphi 0, %s86
      %s104 = sphi 0, %s104
      %s106 = sphi 0, %s104
      %s107 = sphi 0, %s106
      %s121 = sphi 0, %s107
      %s125 = sphi 0, %s125
      %s127 = sphi 0, %s125
      %s128 = sphi 0, %s127
      %s142 = sphi 0, %s128
      %s146 = sphi 0, %s146
      %s148 = sphi 0, %s146
      %s149 = sphi 0, %s148
      %s163 = sphi 0, %s149
      %s167 = sphi 0, %s167
      %s169 = sphi 0, %s167
      %s170 = sphi 0, %s169
      %s184 = sphi 0, %s170
      %s188 = sphi 0, %s188
      %s190 = sphi 0, %s188
      %s191 = sphi 0, %s190
      %s205 = sphi 0, %s191
      %s209 = sphi 0, %s209
      %s211 = sphi 0, %s209
      %s212 = sphi 0, %s211
      %s226 = sphi 0, %s212
      %s230 = sphi 0, %s230
      %s232 = sphi 0, %s230
      %s233 = sphi 0, %s232
      %s247 = sphi 0, %s233
      %s251 = sphi 0, %s251
      %s253 = sphi 0, %s251
      %s254 = sphi 0, %s253
      %s268 = sphi 0, %s254
      %s272 = sphi 0, %s272
      %s274 = sphi 0, %s272
      %s275 = sphi 0, %s274
      %s289 = sphi 0, %s275
      %s293 = sphi 0, %s293
      %s295 = sphi 0, %s293
      %s296 = sphi 0, %s295
      %s310 = sphi 0, %s296
      %s316 = sphi 0, %s318
      %s319 = sphi 0, %s316
      %s320 = sphi 0, %s319
      %s336 = sphi 0, %s320
    $region4: #{tpu_custom_call.1} parent=1 // loop_header_branch
      %31 = sbr.rel (%p29) target = $region8
    $region5: #{tpu_custom_call.1} parent=1 // loop_body
      %s33 = ssub.s32 %s28, 1
      %s34 = ssub.s32 %s28, 2
      %s35 = sadd.s32 %s28, 1
      %s36 = ssub.s32 %s28, %s35
      %p37 = scmp.eq.s32.totalorder %s36, 0
      %s39 = sadd.s32 %s38, 1
      %s40 = scalar_select %p37, %s38, %s39
      %p43 = pneg %p37
      %p44 = scmp.eq.s32.totalorder %s28, 1
      %p45 = por %p43, %p44
      %p46 = scmp.ne.s32.totalorder %s38, %s41
      %p47 = scmp.eq.s32.totalorder %s28, 0
      %p48 = por %p46, %p47
      %p49 = scmp.ne.s32.totalorder %s38, %s41
      %p50 = scmp.eq.s32.totalorder %s33, 1
      %p51 = por %p49, %p50
      %p52 = scmp.ne.s32.totalorder %s41, %s42
      %p53 = scmp.eq.s32.totalorder %s33, 0
      %p54 = por %p52, %p53
      %p55 = scmp.ne.s32.totalorder %s41, %s42
      %p56 = scmp.eq.s32.totalorder %s34, 1
      %p57 = por %p55, %p56
      %p59 = scmp.ne.s32.totalorder %s42, %s58
      %p60 = scmp.eq.s32.totalorder %s34, 0
      %p61 = por %p59, %p60
      %s63 = sadd.s32 %s62, 1
      %p66 = scmp.eq.s32.totalorder %s28, 1
      %p67 = scmp.ne.s32.totalorder %s62, %s64
      %p68 = scmp.eq.s32.totalorder %s28, 0
      %p69 = por %p67, %p68
      %p70 = scmp.ne.s32.totalorder %s62, %s64
      %p71 = scmp.eq.s32.totalorder %s33, 1
      %p72 = por %p70, %p71
      %p73 = scmp.ne.s32.totalorder %s64, %s65
      %p74 = scmp.eq.s32.totalorder %s33, 0
      %p75 = por %p73, %p74
      %p76 = scmp.ne.s32.totalorder %s64, %s65
      %p77 = scmp.eq.s32.totalorder %s34, 1
      %p78 = por %p76, %p77
      %p80 = scmp.ne.s32.totalorder %s65, %s79
      %p81 = scmp.eq.s32.totalorder %s34, 0
      %p82 = por %p80, %p81
      %s84 = sadd.s32 %s83, 1
      %p87 = scmp.eq.s32.totalorder %s28, 1
      %p88 = scmp.ne.s32.totalorder %s83, %s85
      %p89 = scmp.eq.s32.totalorder %s28, 0
      %p90 = por %p88, %p89
      %p91 = scmp.ne.s32.totalorder %s83, %s85
      %p92 = scmp.eq.s32.totalorder %s33, 1
      %p93 = por %p91, %p92
      %p94 = scmp.ne.s32.totalorder %s85, %s86
      %p95 = scmp.eq.s32.totalorder %s33, 0
      %p96 = por %p94, %p95
      %p97 = scmp.ne.s32.totalorder %s85, %s86
      %p98 = scmp.eq.s32.totalorder %s34, 1
      %p99 = por %p97, %p98
      %p101 = scmp.ne.s32.totalorder %s86, %s100
      %p102 = scmp.eq.s32.totalorder %s34, 0
      %p103 = por %p101, %p102
      %s105 = sadd.s32 %s104, 1
      %p108 = scmp.eq.s32.totalorder %s28, 1
      %p109 = scmp.ne.s32.totalorder %s104, %s106
      %p110 = scmp.eq.s32.totalorder %s28, 0
      %p111 = por %p109, %p110
      %p112 = scmp.ne.s32.totalorder %s104, %s106
      %p113 = scmp.eq.s32.totalorder %s33, 1
      %p114 = por %p112, %p113
      %p115 = scmp.ne.s32.totalorder %s106, %s107
      %p116 = scmp.eq.s32.totalorder %s33, 0
      %p117 = por %p115, %p116
      %p118 = scmp.ne.s32.totalorder %s106, %s107
      %p119 = scmp.eq.s32.totalorder %s34, 1
      %p120 = por %p118, %p119
      %p122 = scmp.ne.s32.totalorder %s107, %s121
      %p123 = scmp.eq.s32.totalorder %s34, 0
      %p124 = por %p122, %p123
      %s126 = sadd.s32 %s125, 1
      %p129 = scmp.eq.s32.totalorder %s28, 1
      %p130 = scmp.ne.s32.totalorder %s125, %s127
      %p131 = scmp.eq.s32.totalorder %s28, 0
      %p132 = por %p130, %p131
      %p133 = scmp.ne.s32.totalorder %s125, %s127
      %p134 = scmp.eq.s32.totalorder %s33, 1
      %p135 = por %p133, %p134
      %p136 = scmp.ne.s32.totalorder %s127, %s128
      %p137 = scmp.eq.s32.totalorder %s33, 0
      %p138 = por %p136, %p137
      %p139 = scmp.ne.s32.totalorder %s127, %s128
      %p140 = scmp.eq.s32.totalorder %s34, 1
      %p141 = por %p139, %p140
      %p143 = scmp.ne.s32.totalorder %s128, %s142
      %p144 = scmp.eq.s32.totalorder %s34, 0
      %p145 = por %p143, %p144
      %s147 = sadd.s32 %s146, 1
      %p150 = scmp.eq.s32.totalorder %s28, 1
      %p151 = scmp.ne.s32.totalorder %s146, %s148
      %p152 = scmp.eq.s32.totalorder %s28, 0
      %p153 = por %p151, %p152
      %p154 = scmp.ne.s32.totalorder %s146, %s148
      %p155 = scmp.eq.s32.totalorder %s33, 1
      %p156 = por %p154, %p155
      %p157 = scmp.ne.s32.totalorder %s148, %s149
      %p158 = scmp.eq.s32.totalorder %s33, 0
      %p159 = por %p157, %p158
      %p160 = scmp.ne.s32.totalorder %s148, %s149
      %p161 = scmp.eq.s32.totalorder %s34, 1
      %p162 = por %p160, %p161
      %p164 = scmp.ne.s32.totalorder %s149, %s163
      %p165 = scmp.eq.s32.totalorder %s34, 0
      %p166 = por %p164, %p165
      %s168 = sadd.s32 %s167, 1
      %p171 = scmp.eq.s32.totalorder %s28, 1
      %p172 = scmp.ne.s32.totalorder %s167, %s169
      %p173 = scmp.eq.s32.totalorder %s28, 0
      %p174 = por %p172, %p173
      %p175 = scmp.ne.s32.totalorder %s167, %s169
      %p176 = scmp.eq.s32.totalorder %s33, 1
      %p177 = por %p175, %p176
      %p178 = scmp.ne.s32.totalorder %s169, %s170
      %p179 = scmp.eq.s32.totalorder %s33, 0
      %p180 = por %p178, %p179
      %p181 = scmp.ne.s32.totalorder %s169, %s170
      %p182 = scmp.eq.s32.totalorder %s34, 1
      %p183 = por %p181, %p182
      %p185 = scmp.ne.s32.totalorder %s170, %s184
      %p186 = scmp.eq.s32.totalorder %s34, 0
      %p187 = por %p185, %p186
      %s189 = sadd.s32 %s188, 1
      %p192 = scmp.eq.s32.totalorder %s28, 1
      %p193 = scmp.ne.s32.totalorder %s188, %s190
      %p194 = scmp.eq.s32.totalorder %s28, 0
      %p195 = por %p193, %p194
      %p196 = scmp.ne.s32.totalorder %s188, %s190
      %p197 = scmp.eq.s32.totalorder %s33, 1
      %p198 = por %p196, %p197
      %p199 = scmp.ne.s32.totalorder %s190, %s191
      %p200 = scmp.eq.s32.totalorder %s33, 0
      %p201 = por %p199, %p200
      %p202 = scmp.ne.s32.totalorder %s190, %s191
      %p203 = scmp.eq.s32.totalorder %s34, 1
      %p204 = por %p202, %p203
      %p206 = scmp.ne.s32.totalorder %s191, %s205
      %p207 = scmp.eq.s32.totalorder %s34, 0
      %p208 = por %p206, %p207
      %s210 = sadd.s32 %s209, 1
      %p213 = scmp.eq.s32.totalorder %s28, 1
      %p214 = scmp.ne.s32.totalorder %s209, %s211
      %p215 = scmp.eq.s32.totalorder %s28, 0
      %p216 = por %p214, %p215
      %p217 = scmp.ne.s32.totalorder %s209, %s211
      %p218 = scmp.eq.s32.totalorder %s33, 1
      %p219 = por %p217, %p218
      %p220 = scmp.ne.s32.totalorder %s211, %s212
      %p221 = scmp.eq.s32.totalorder %s33, 0
      %p222 = por %p220, %p221
      %p223 = scmp.ne.s32.totalorder %s211, %s212
      %p224 = scmp.eq.s32.totalorder %s34, 1
      %p225 = por %p223, %p224
      %p227 = scmp.ne.s32.totalorder %s212, %s226
      %p228 = scmp.eq.s32.totalorder %s34, 0
      %p229 = por %p227, %p228
      %s231 = sadd.s32 %s230, 1
      %p234 = scmp.eq.s32.totalorder %s28, 1
      %p235 = scmp.ne.s32.totalorder %s230, %s232
      %p236 = scmp.eq.s32.totalorder %s28, 0
      %p237 = por %p235, %p236
      %p238 = scmp.ne.s32.totalorder %s230, %s232
      %p239 = scmp.eq.s32.totalorder %s33, 1
      %p240 = por %p238, %p239
      %p241 = scmp.ne.s32.totalorder %s232, %s233
      %p242 = scmp.eq.s32.totalorder %s33, 0
      %p243 = por %p241, %p242
      %p244 = scmp.ne.s32.totalorder %s232, %s233
      %p245 = scmp.eq.s32.totalorder %s34, 1
      %p246 = por %p244, %p245
      %p248 = scmp.ne.s32.totalorder %s233, %s247
      %p249 = scmp.eq.s32.totalorder %s34, 0
      %p250 = por %p248, %p249
      %s252 = sadd.s32 %s251, 1
      %p255 = scmp.eq.s32.totalorder %s28, 1
      %p256 = scmp.ne.s32.totalorder %s251, %s253
      %p257 = scmp.eq.s32.totalorder %s28, 0
      %p258 = por %p256, %p257
      %p259 = scmp.ne.s32.totalorder %s251, %s253
      %p260 = scmp.eq.s32.totalorder %s33, 1
      %p261 = por %p259, %p260
      %p262 = scmp.ne.s32.totalorder %s253, %s254
      %p263 = scmp.eq.s32.totalorder %s33, 0
      %p264 = por %p262, %p263
      %p265 = scmp.ne.s32.totalorder %s253, %s254
      %p266 = scmp.eq.s32.totalorder %s34, 1
      %p267 = por %p265, %p266
      %p269 = scmp.ne.s32.totalorder %s254, %s268
      %p270 = scmp.eq.s32.totalorder %s34, 0
      %p271 = por %p269, %p270
      %s273 = sadd.s32 %s272, 1
      %p276 = scmp.eq.s32.totalorder %s28, 1
      %p277 = scmp.ne.s32.totalorder %s272, %s274
      %p278 = scmp.eq.s32.totalorder %s28, 0
      %p279 = por %p277, %p278
      %p280 = scmp.ne.s32.totalorder %s272, %s274
      %p281 = scmp.eq.s32.totalorder %s33, 1
      %p282 = por %p280, %p281
      %p283 = scmp.ne.s32.totalorder %s274, %s275
      %p284 = scmp.eq.s32.totalorder %s33, 0
      %p285 = por %p283, %p284
      %p286 = scmp.ne.s32.totalorder %s274, %s275
      %p287 = scmp.eq.s32.totalorder %s34, 1
      %p288 = por %p286, %p287
      %p290 = scmp.ne.s32.totalorder %s275, %s289
      %p291 = scmp.eq.s32.totalorder %s34, 0
      %p292 = por %p290, %p291
      %s294 = sadd.s32 %s293, 1
      %p297 = scmp.eq.s32.totalorder %s28, 1
      %p298 = scmp.ne.s32.totalorder %s293, %s295
      %p299 = scmp.eq.s32.totalorder %s28, 0
      %p300 = por %p298, %p299
      %p301 = scmp.ne.s32.totalorder %s293, %s295
      %p302 = scmp.eq.s32.totalorder %s33, 1
      %p303 = por %p301, %p302
      %p304 = scmp.ne.s32.totalorder %s295, %s296
      %p305 = scmp.eq.s32.totalorder %s33, 0
      %p306 = por %p304, %p305
      %p307 = scmp.ne.s32.totalorder %s295, %s296
      %p308 = scmp.eq.s32.totalorder %s34, 1
      %p309 = por %p307, %p308
      %p311 = scmp.ne.s32.totalorder %s296, %s310
      %p312 = scmp.eq.s32.totalorder %s34, 0
      %p313 = por %p311, %p312
      %s314 = ssub.s32 %s28, %s35
      %p315 = scmp.eq.s32.totalorder %s314, 0
      %s317 = sadd.s32 %s316, 1
      %s318 = scalar_select %p315, %s316, %s317
      %p321 = pneg %p315
      %p322 = scmp.eq.s32.totalorder %s28, 1
      %p323 = por %p321, %p322
      %p324 = scmp.ne.s32.totalorder %s316, %s319
      %p325 = scmp.eq.s32.totalorder %s28, 0
      %p326 = por %p324, %p325
      %p327 = scmp.ne.s32.totalorder %s316, %s319
      %p328 = scmp.eq.s32.totalorder %s33, 1
      %p329 = por %p327, %p328
      %p330 = scmp.ne.s32.totalorder %s319, %s320
      %p331 = scmp.eq.s32.totalorder %s33, 0
      %p332 = por %p330, %p331
      %p333 = scmp.ne.s32.totalorder %s319, %s320
      %p334 = scmp.eq.s32.totalorder %s34, 1
      %p335 = por %p333, %p334
      %p337 = scmp.ne.s32.totalorder %s320, %s336
      %p338 = scmp.eq.s32.totalorder %s34, 0
      %p339 = por %p337, %p338
      %p340 = scmp.le.s32.totalorder 1, %s28
      %p341 = scmp.lt.s32.totalorder %s28, 3
      %p342 = pnand %p340, %p341
      %p343 = pneg %p342
      // Predicated region
      $region9: #{tpu_custom_call.1} parent=5 // pred_check
        _
      $region10: #{tpu_custom_call.1} parent=5 // pred_check_branch
        %345 = sbr.rel (%p342) target = $region12
      $region11: #{tpu_custom_call.1} parent=5 // pred_region
        %s346 = ssub.s32 %s28, 1
        // Predicated region
        $region13: #{tpu_custom_call.1} parent=11 // pred_check
          %p347 = pneg %p75
        $region14: #{tpu_custom_call.1} parent=11 // pred_check_branch
          %349 = sbr.rel (%p347) target = $region16
        $region15: #{tpu_custom_call.1} parent=11 // pred_region
          %s351 = ssub.s32 16, 16
          %352 = vsyncadd [#allocation7], %s351
          %s354 = sshll.u32 [#allocation6], 4
          %s355 = int_to_ptr.vmem [resolvable:$true] %s354
          %357 = dma.hbm_to_vmem [thread:$0]  %s1, 16, %s355, [#allocation7]
        $region16: #{tpu_custom_call.1} parent=11 // pred_fallthru
          _
        // Predicated region
        $region17: #{tpu_custom_call.1} parent=11 // pred_check
          %p358 = pneg %p96
        $region18: #{tpu_custom_call.1} parent=11 // pred_check_branch
          %360 = sbr.rel (%p358) target = $region20
        $region19: #{tpu_custom_call.1} parent=11 // pred_region
          %s362 = ssub.s32 16, 16
          %363 = vsyncadd [#allocation7], %s362
          %s365 = sshll.u32 [#allocation8], 4
          %s366 = int_to_ptr.vmem [resolvable:$true] %s365
          %368 = dma.hbm_to_vmem [thread:$0]  %s2, 16, %s366, [#allocation7]
        $region20: #{tpu_custom_call.1} parent=11 // pred_fallthru
          _
        // Predicated region
        $region21: #{tpu_custom_call.1} parent=11 // pred_check
          %p369 = pneg %p117
        $region22: #{tpu_custom_call.1} parent=11 // pred_check_branch
          %371 = sbr.rel (%p369) target = $region24
        $region23: #{tpu_custom_call.1} parent=11 // pred_region
          %s373 = ssub.s32 3072, 3072
          %374 = vsyncadd [#allocation10], %s373
          %s375 = sshll.u32 [#allocation9], 4
          %s376 = int_to_ptr.vmem [resolvable:$true] %s375
          %381 = dma.hbm_to_vmem [thread:$0]  %s3, 3072, %s376, [#allocation10], 64, 64, 4
        $region24: #{tpu_custom_call.1} parent=11 // pred_fallthru
          _
        // Predicated region
        $region25: #{tpu_custom_call.1} parent=11 // pred_check
          %p382 = pneg %p138
        $region26: #{tpu_custom_call.1} parent=11 // pred_check_branch
          %384 = sbr.rel (%p382) target = $region28
        $region27: #{tpu_custom_call.1} parent=11 // pred_region
          _
        $region28: #{tpu_custom_call.1} parent=11 // pred_fallthru
          _
        // Predicated region
        $region29: #{tpu_custom_call.1} parent=11 // pred_check
          %p385 = pneg %p159
        $region30: #{tpu_custom_call.1} parent=11 // pred_check_branch
          %387 = sbr.rel (%p385) target = $region32
        $region31: #{tpu_custom_call.1} parent=11 // pred_region
          %s389 = ssub.s32 1024, 1024
          %390 = vsyncadd [#allocation10], %s389
          %s391 = sshll.u32 [#allocation11], 4
          %s392 = int_to_ptr.vmem [resolvable:$true] %s391
          %397 = dma.hbm_to_vmem [thread:$0]  %s5, 1024, %s392, [#allocation10], 64, 64, 4
        $region32: #{tpu_custom_call.1} parent=11 // pred_fallthru
          _
        // Predicated region
        $region33: #{tpu_custom_call.1} parent=11 // pred_check
          %p398 = pneg %p180
        $region34: #{tpu_custom_call.1} parent=11 // pred_check_branch
          %400 = sbr.rel (%p398) target = $region36
        $region35: #{tpu_custom_call.1} parent=11 // pred_region
          _
        $region36: #{tpu_custom_call.1} parent=11 // pred_fallthru
          _
        // Predicated region
        $region37: #{tpu_custom_call.1} parent=11 // pred_check
          %p401 = pneg %p201
        $region38: #{tpu_custom_call.1} parent=11 // pred_check_branch
          %403 = sbr.rel (%p401) target = $region40
        $region39: #{tpu_custom_call.1} parent=11 // pred_region
          _
        $region40: #{tpu_custom_call.1} parent=11 // pred_fallthru
          _
        // Predicated region
        $region41: #{tpu_custom_call.1} parent=11 // pred_check
          %p404 = pneg %p222
        $region42: #{tpu_custom_call.1} parent=11 // pred_check_branch
          %406 = sbr.rel (%p404) target = $region44
        $region43: #{tpu_custom_call.1} parent=11 // pred_region
          _
        $region44: #{tpu_custom_call.1} parent=11 // pred_fallthru
          _
        // Predicated region
        $region45: #{tpu_custom_call.1} parent=11 // pred_check
          %p407 = pneg %p243
        $region46: #{tpu_custom_call.1} parent=11 // pred_check_branch
          %409 = sbr.rel (%p407) target = $region48
        $region47: #{tpu_custom_call.1} parent=11 // pred_region
          %s411 = ssub.s32 4096, 4096
          %412 = vsyncadd [#allocation13], %s411
          %s413 = sshll.u32 [#allocation12], 4
          %s414 = int_to_ptr.vmem [resolvable:$true] %s413
          %419 = dma.hbm_to_vmem [thread:$0]  %s9, 4096, %s414, [#allocation13], 64, 64, 4
        $region48: #{tpu_custom_call.1} parent=11 // pred_fallthru
          _
        // Predicated region
        $region49: #{tpu_custom_call.1} parent=11 // pred_check
          %p420 = pneg %p264
        $region50: #{tpu_custom_call.1} parent=11 // pred_check_branch
          %422 = sbr.rel (%p420) target = $region52
        $region51: #{tpu_custom_call.1} parent=11 // pred_region
          _
        $region52: #{tpu_custom_call.1} parent=11 // pred_fallthru
          _
        // Predicated region
        $region53: #{tpu_custom_call.1} parent=11 // pred_check
          %p423 = pneg %p285
        $region54: #{tpu_custom_call.1} parent=11 // pred_check_branch
          %425 = sbr.rel (%p423) target = $region56
        $region55: #{tpu_custom_call.1} parent=11 // pred_region
          %s427 = ssub.s32 4096, 4096
          %428 = vsyncadd [#allocation13], %s427
          %s429 = sshll.u32 [#allocation14], 4
          %s430 = int_to_ptr.vmem [resolvable:$true] %s429
          %435 = dma.hbm_to_vmem [thread:$0]  %s11, 4096, %s430, [#allocation13], 256, 256, 16
        $region56: #{tpu_custom_call.1} parent=11 // pred_fallthru
          _
        // Predicated region
        $region57: #{tpu_custom_call.1} parent=11 // pred_check
          %p436 = pneg %p306
        $region58: #{tpu_custom_call.1} parent=11 // pred_check_branch
          %438 = sbr.rel (%p436) target = $region60
        $region59: #{tpu_custom_call.1} parent=11 // pred_region
          _
        $region60: #{tpu_custom_call.1} parent=11 // pred_fallthru
          _
      $region12: #{tpu_custom_call.1} parent=5 // pred_fallthru
        _
      %p439 = scmp.lt.s32.totalorder %s28, 2
      // Predicated region
      $region61: #{tpu_custom_call.1} parent=5 // pred_check
        %p440 = pneg %p439
      $region62: #{tpu_custom_call.1} parent=5 // pred_check_branch
        %442 = sbr.rel (%p440) target = $region64
      $region63: #{tpu_custom_call.1} parent=5 // pred_region
        // Predicated region
        $region65: #{tpu_custom_call.1} parent=63 // pred_check
          %p443 = pneg %p48
        $region66: #{tpu_custom_call.1} parent=63 // pred_check_branch
          %445 = sbr.rel (%p443) target = $region68
        $region67: #{tpu_custom_call.1} parent=63 // pred_region
          %s446 = sand.u32 %s38, 1
          %s447 = scalar_lea.sflag [#allocation4], %s446
          %s448 = sand.u32 %s38, 1
          %s449 = smul.addr %s448, 16
          %s450 = scalar_lea.vmem [#allocation3], %s449
          %s452 = ssub.s32 256, 256
          %453 = vsyncadd %s447, %s452
          %s454 = smul.addr %s28, 2
          %s455 = smul.addr %s454, 128
          %s456 = scalar_lea.hbm %s0, %s455
          %s457 = sshll.u32 %s450, 4
          %s458 = int_to_ptr.vmem [resolvable:$true] %s457
          %463 = dma.hbm_to_vmem [thread:$0]  %s456, 256, %s458, %s447, 128, 128, 8
        $region68: #{tpu_custom_call.1} parent=63 // pred_fallthru
          _
      $region64: #{tpu_custom_call.1} parent=5 // pred_fallthru
        _
      %p464 = scmp.le.s32.totalorder 1, %s28
      %p465 = scmp.lt.s32.totalorder %s28, 3
      %p466 = pnand %p464, %p465
      %p467 = pneg %p466
      // Predicated region
      $region69: #{tpu_custom_call.1} parent=5 // pred_check
        _
      $region70: #{tpu_custom_call.1} parent=5 // pred_check_branch
        %469 = sbr.rel (%p466) target = $region72
      $region71: #{tpu_custom_call.1} parent=5 // pred_region
        %s470 = ssub.s32 %s28, 1
        %s471 = sand.u32 %s41, 1
        %s472 = scalar_lea.sflag [#allocation4], %s471
        %s473 = sand.u32 %s41, 1
        %s474 = smul.addr %s473, 16
        %s475 = scalar_lea.vmem [#allocation3], %s474
        // Predicated region
        $region73: #{tpu_custom_call.1} parent=71 // pred_check
          %p476 = pneg %p54
        $region74: #{tpu_custom_call.1} parent=71 // pred_check_branch
          %478 = sbr.rel (%p476) target = $region76
        $region75: #{tpu_custom_call.1} parent=71 // pred_region
          %479 = dma.done %s472, 256
        $region76: #{tpu_custom_call.1} parent=71 // pred_fallthru
          _
        // Predicated region
        $region77: #{tpu_custom_call.1} parent=71 // pred_check
          %p480 = pneg %p75
        $region78: #{tpu_custom_call.1} parent=71 // pred_check_branch
          %482 = sbr.rel (%p480) target = $region80
        $region79: #{tpu_custom_call.1} parent=71 // pred_region
          %483 = dma.done [#allocation7], 16
        $region80: #{tpu_custom_call.1} parent=71 // pred_fallthru
          _
        // Predicated region
        $region81: #{tpu_custom_call.1} parent=71 // pred_check
          %p484 = pneg %p96
        $region82: #{tpu_custom_call.1} parent=71 // pred_check_branch
          %486 = sbr.rel (%p484) target = $region84
        $region83: #{tpu_custom_call.1} parent=71 // pred_region
          %487 = dma.done [#allocation7], 16
        $region84: #{tpu_custom_call.1} parent=71 // pred_fallthru
          _
        // Predicated region
        $region85: #{tpu_custom_call.1} parent=71 // pred_check
          %p488 = pneg %p117
        $region86: #{tpu_custom_call.1} parent=71 // pred_check_branch
          %490 = sbr.rel (%p488) target = $region88
        $region87: #{tpu_custom_call.1} parent=71 // pred_region
          %491 = dma.done [#allocation10], 3072
        $region88: #{tpu_custom_call.1} parent=71 // pred_fallthru
          _
        // Predicated region
        $region89: #{tpu_custom_call.1} parent=71 // pred_check
          %p492 = pneg %p159
        $region90: #{tpu_custom_call.1} parent=71 // pred_check_branch
          %494 = sbr.rel (%p492) target = $region92
        $region91: #{tpu_custom_call.1} parent=71 // pred_region
          %495 = dma.done [#allocation10], 1024
        $region92: #{tpu_custom_call.1} parent=71 // pred_fallthru
          _
        // Predicated region
        $region93: #{tpu_custom_call.1} parent=71 // pred_check
          %p496 = pneg %p243
        $region94: #{tpu_custom_call.1} parent=71 // pred_check_branch
          %498 = sbr.rel (%p496) target = $region96
        $region95: #{tpu_custom_call.1} parent=71 // pred_region
          %499 = dma.done [#allocation13], 4096
        $region96: #{tpu_custom_call.1} parent=71 // pred_fallthru
          _
        // Predicated region
        $region97: #{tpu_custom_call.1} parent=71 // pred_check
          %p500 = pneg %p285
        $region98: #{tpu_custom_call.1} parent=71 // pred_check_branch
          %502 = sbr.rel (%p500) target = $region100
        $region99: #{tpu_custom_call.1} parent=71 // pred_region
          %503 = dma.done [#allocation13], 4096
        $region100: #{tpu_custom_call.1} parent=71 // pred_fallthru
          _
        %s504 = sand.u32 %s41, 1
        %s505 = scalar_lea.sflag [#allocation4], %s504
        %s506 = sand.u32 %s41, 1
        %s507 = smul.addr %s506, 16
        %s508 = scalar_lea.vmem [#allocation3], %s507
        %p509 = pneg %p54
        %p510 = pneg %p51
        %p511 = pneg %p75
        %p512 = pneg %p72
        %p513 = pneg %p96
        %p514 = pneg %p93
        %p515 = pneg %p117
        %p516 = pneg %p114
        %p517 = pneg %p138
        %p518 = pneg %p135
        %p519 = pneg %p159
        %p520 = pneg %p156
        %p521 = pneg %p180
        %p522 = pneg %p177
        %p523 = pneg %p201
        %p524 = pneg %p198
        %p525 = pneg %p222
        %p526 = pneg %p219
        %p527 = pneg %p243
        %p528 = pneg %p240
        %p529 = pneg %p264
        %p530 = pneg %p261
        %p531 = pneg %p285
        %p532 = pneg %p282
        %p533 = pneg %p306
        %p534 = pneg %p303
        %p535 = pneg %p332
        %p536 = pneg %p329
        %s537 = sand.u32 %s319, 1
        %s538 = scalar_lea.sflag [#allocation5], %s537
        %s539 = sand.u32 %s319, 1
        %s540 = smul.addr %s539, 16
        %s541 = scalar_lea.vmem [#allocation15], %s540
        %v543 = vld [vmem:[%s475] sm:$0xff]
        %v544 = vld [vmem:[%s475 + $0x8] sm:$0xff]
        %v545 = vld [vmem:[#allocation6] sm:$0x1]
        %v546 = vld [vmem:[#allocation8] sm:$0x1]
        %547 = vadd.xlane.f32.xlu0 %v543
        %v548 = vpop.xlane.xlu0 %547
        %549 = vadd.xlane.f32.xlu0 %v544
        %v550 = vpop.xlane.xlu0 %549
        %v551 = vrcp.pop 128.0
        %v552 = vmul.f32 %v548, %v551
        %v553 = vmul.f32 %v550, %v551
        %v554 = vsub.f32 %v543, %v552
        %v555 = vsub.f32 %v544, %v553
        %v556 = vmul.f32 %v554, %v554
        %v557 = vmul.f32 %v555, %v555
        %558 = vadd.xlane.f32.xlu0 %v556
        %v559 = vpop.xlane.xlu0 %558
        %560 = vadd.xlane.f32.xlu0 %v557
        %v561 = vpop.xlane.xlu0 %560
        %v562 = vmul.f32 %v559, %v551
        %v563 = vmul.f32 %v561, %v551
        %v564 = vadd.f32 %v562, 1e-06
        %v565 = vadd.f32 %v563, 1e-06
        %v566 = vrsqrt.pop %v564
        %v567 = vrsqrt.pop %v565
        %v568 = vmul.f32 %v554, %v566
        %v569 = vmul.f32 %v555, %v567
        %v571 = vlaneseq
        %v572 = vshrl.u32 %v571, 7
        %v573 = vsub.s32 0, %v572
        %v574 = vrot.slane %v545, %v573
        %v576 = vmul.f32 %v568, %v574
        %v577 = vmul.f32 %v569, %v574
        %v579 = vlaneseq
        %v580 = vshrl.u32 %v579, 7
        %v581 = vsub.s32 0, %v580
        %v582 = vrot.slane %v546, %v581
        %v584 = vadd.f32 %v576, %v582
        %v585 = vadd.f32 %v577, %v582
        %v586 = vpack.c.bf16 %v585, %v584
        %v587 = vld [vmem:[#allocation9] sm:$0xf]
        %v588 = vld [vmem:[#allocation9 + $0x4] sm:$0xf]
        %v589 = vld [vmem:[#allocation9 + $0x8] sm:$0xf]
        %v590 = vld [vmem:[#allocation9 + $0xc] sm:$0xf]
        %v591 = vld [vmem:[#allocation9 + $0x10] sm:$0xf]
        %v592 = vld [vmem:[#allocation9 + $0x14] sm:$0xf]
        %v593 = vld [vmem:[#allocation9 + $0x18] sm:$0xf]
        %v594 = vld [vmem:[#allocation9 + $0x1c] sm:$0xf]
        %v595 = vld [vmem:[#allocation9 + $0x20] sm:$0xf]
        %v596 = vld [vmem:[#allocation9 + $0x24] sm:$0xf]
        %v597 = vld [vmem:[#allocation9 + $0x28] sm:$0xf]
        %v598 = vld [vmem:[#allocation9 + $0x2c] sm:$0xf]
        %v599 = vld [vmem:[#allocation9 + $0x30] sm:$0xf]
        %v600 = vld [vmem:[#allocation9 + $0x34] sm:$0xf]
        %v601 = vld [vmem:[#allocation9 + $0x38] sm:$0xf]
        %v602 = vld [vmem:[#allocation9 + $0x3c] sm:$0xf]
        %v603 = vld [vmem:[#allocation9 + $0x40] sm:$0xf]
        %v604 = vld [vmem:[#allocation9 + $0x44] sm:$0xf]
        %v605 = vld [vmem:[#allocation9 + $0x48] sm:$0xf]
        %v606 = vld [vmem:[#allocation9 + $0x4c] sm:$0xf]
        %v607 = vld [vmem:[#allocation9 + $0x50] sm:$0xf]
        %v608 = vld [vmem:[#allocation9 + $0x54] sm:$0xf]
        %v609 = vld [vmem:[#allocation9 + $0x58] sm:$0xf]
        %v610 = vld [vmem:[#allocation9 + $0x5c] sm:$0xf]
        %v611 = vld [vmem:[#allocation9 + $0x60] sm:$0xf]
        %v612 = vld [vmem:[#allocation9 + $0x64] sm:$0xf]
        %v613 = vld [vmem:[#allocation9 + $0x68] sm:$0xf]
        %v614 = vld [vmem:[#allocation9 + $0x6c] sm:$0xf]
        %v615 = vld [vmem:[#allocation9 + $0x70] sm:$0xf]
        %v616 = vld [vmem:[#allocation9 + $0x74] sm:$0xf]
        %v617 = vld [vmem:[#allocation9 + $0x78] sm:$0xf]
        %v618 = vld [vmem:[#allocation9 + $0x7c] sm:$0xf]
        %v619 = vld [vmem:[#allocation9 + $0x80] sm:$0xf]
        %v620 = vld [vmem:[#allocation9 + $0x84] sm:$0xf]
        %v621 = vld [vmem:[#allocation9 + $0x88] sm:$0xf]
        %v622 = vld [vmem:[#allocation9 + $0x8c] sm:$0xf]
        %v623 = vld [vmem:[#allocation9 + $0x90] sm:$0xf]
        %v624 = vld [vmem:[#allocation9 + $0x94] sm:$0xf]
        %v625 = vld [vmem:[#allocation9 + $0x98] sm:$0xf]
        %v626 = vld [vmem:[#allocation9 + $0x9c] sm:$0xf]
        %v627 = vld [vmem:[#allocation9 + $0xa0] sm:$0xf]
        %v628 = vld [vmem:[#allocation9 + $0xa4] sm:$0xf]
        %v629 = vld [vmem:[#allocation9 + $0xa8] sm:$0xf]
        %v630 = vld [vmem:[#allocation9 + $0xac] sm:$0xf]
        %v631 = vld [vmem:[#allocation9 + $0xb0] sm:$0xf]
        %v632 = vld [vmem:[#allocation9 + $0xb4] sm:$0xf]
        %v633 = vld [vmem:[#allocation9 + $0xb8] sm:$0xf]
        %v634 = vld [vmem:[#allocation9 + $0xbc] sm:$0xf]
        %v635 = vld [vmem:[%s4] sm:$0x7]
        %v637 = vlaneseq
        %v638 = vshrl.u32 %v637, 7
        %v639 = vsub.s32 0, %v638
        %v640 = vrot.slane %v635, %v639
        %v641 = vlaneseq
        %v642 = vshrl.u32 %v641, 7
        %v643 = vsub.s32 1, %v642
        %v644 = vrot.slane %v635, %v643
        %v645 = vlaneseq
        %v646 = vshrl.u32 %v645, 7
        %v647 = vsub.s32 2, %v646
        %v648 = vrot.slane %v635, %v647
        %v700 = vunpack.c.l.b16 %v587
        %v701 = vunpack.c.l.b16 %v588
        %v702 = vunpack.c.l.b16 %v589
        %v703 = vunpack.c.l.b16 %v590
        %v704 = vunpack.c.l.b16 %v591
        %v705 = vunpack.c.l.b16 %v592
        %v706 = vunpack.c.l.b16 %v593
        %v707 = vunpack.c.l.b16 %v594
        %v708 = vunpack.c.l.b16 %v595
        %v709 = vunpack.c.l.b16 %v596
        %v710 = vunpack.c.l.b16 %v597
        %v711 = vunpack.c.l.b16 %v598
        %v712 = vunpack.c.l.b16 %v599
        %v713 = vunpack.c.l.b16 %v600
        %v714 = vunpack.c.l.b16 %v601
        %v715 = vunpack.c.l.b16 %v602
        %v716 = vunpack.c.l.b16 %v603
        %v717 = vunpack.c.l.b16 %v604
        %v718 = vunpack.c.l.b16 %v605
        %v719 = vunpack.c.l.b16 %v606
        %v720 = vunpack.c.l.b16 %v607
        %v721 = vunpack.c.l.b16 %v608
        %v722 = vunpack.c.l.b16 %v609
        %v723 = vunpack.c.l.b16 %v610
        %v724 = vunpack.c.l.b16 %v611
        %v725 = vunpack.c.l.b16 %v612
        %v726 = vunpack.c.l.b16 %v613
        %v727 = vunpack.c.l.b16 %v614
        %v728 = vunpack.c.l.b16 %v615
        %v729 = vunpack.c.l.b16 %v616
        %v730 = vunpack.c.l.b16 %v617
        %v731 = vunpack.c.l.b16 %v618
        %v732 = vunpack.c.l.b16 %v619
        %v733 = vunpack.c.l.b16 %v620
        %v734 = vunpack.c.l.b16 %v621
        %v735 = vunpack.c.l.b16 %v622
        %v736 = vunpack.c.l.b16 %v623
        %v737 = vunpack.c.l.b16 %v624
        %v738 = vunpack.c.l.b16 %v625
        %v739 = vunpack.c.l.b16 %v626
        %v740 = vunpack.c.l.b16 %v627
        %v741 = vunpack.c.l.b16 %v628
        %v742 = vunpack.c.l.b16 %v629
        %v743 = vunpack.c.l.b16 %v630
        %v744 = vunpack.c.l.b16 %v631
        %v745 = vunpack.c.l.b16 %v632
        %v746 = vunpack.c.l.b16 %v633
        %v747 = vunpack.c.l.b16 %v634
        %v748 = vpack.c.b16 %v701, %v700
        %v749 = vpack.c.b16 %v703, %v702
        %v750 = vpack.c.b16 %v705, %v704
        %v751 = vpack.c.b16 %v707, %v706
        %v752 = vpack.c.b16 %v709, %v708
        %v753 = vpack.c.b16 %v711, %v710
        %v754 = vpack.c.b16 %v713, %v712
        %v755 = vpack.c.b16 %v715, %v714
        %v756 = vpack.c.b16 %v717, %v716
        %v757 = vpack.c.b16 %v719, %v718
        %v758 = vpack.c.b16 %v721, %v720
        %v759 = vpack.c.b16 %v723, %v722
        %v760 = vpack.c.b16 %v725, %v724
        %v761 = vpack.c.b16 %v727, %v726
        %v762 = vpack.c.b16 %v729, %v728
        %v763 = vpack.c.b16 %v731, %v730
        %v764 = vpack.c.b16 %v733, %v732
        %v765 = vpack.c.b16 %v735, %v734
        %v766 = vpack.c.b16 %v737, %v736
        %v767 = vpack.c.b16 %v739, %v738
        %v768 = vpack.c.b16 %v741, %v740
        %v769 = vpack.c.b16 %v743, %v742
        %v770 = vpack.c.b16 %v745, %v744
        %v771 = vpack.c.b16 %v747, %v746
        %796 = vmatprep.subr.bf16.mxu0 0
        %797 = vmatpush1.bf16.xpose.msra.mxu0 %v748
        %798 = vmatprep.subr.bf16.mxu0 0
        %799 = vmatpush1.bf16.xpose.msra.mxu0 %v749
        %800 = vmatprep.subr.bf16.mxu0 0
        %801 = vmatpush1.bf16.xpose.msra.mxu0 %v750
        %802 = vmatprep.subr.bf16.mxu0 0
        %803 = vmatpush1.bf16.xpose.msra.mxu0 %v751
        %804 = vmatprep.subr.bf16.mxu0 0
        %805 = vmatpush1.bf16.xpose.msra.mxu0 %v752
        %806 = vmatprep.subr.bf16.mxu0 0
        %807 = vmatpush1.bf16.xpose.msra.mxu0 %v753
        %808 = vmatprep.subr.bf16.mxu0 0
        %809 = vmatpush1.bf16.xpose.msra.mxu0 %v754
        %810 = vmatprep.subr.bf16.mxu0 0
        %811 = vmatpush1.bf16.xpose.msra.mxu0 %v755
        %812 = vmatprep.subr.bf16.mxu0 0
        %813 = vmatpush1.bf16.xpose.msra.mxu0 %v756
        %814 = vmatprep.subr.bf16.mxu0 0
        %815 = vmatpush1.bf16.xpose.msra.mxu0 %v757
        %816 = vmatprep.subr.bf16.mxu0 0
        %817 = vmatpush1.bf16.xpose.msra.mxu0 %v758
        %818 = vmatprep.subr.bf16.mxu0 0
        %819 = vmatpush1.bf16.xpose.msra.mxu0 %v759
        %820 = vmatprep.subr.bf16.mxu0 0
        %821 = vmatpush1.bf16.xpose.msra.mxu0 %v760
        %822 = vmatprep.subr.bf16.mxu0 0
        %823 = vmatpush1.bf16.xpose.msra.mxu0 %v761
        %824 = vmatprep.subr.bf16.mxu0 0
        %825 = vmatpush1.bf16.xpose.msra.mxu0 %v762
        %826 = vmatprep.subr.bf16.mxu0 0
        %827 = vmatpush1.bf16.xpose.msra.mxu0 %v763
        %828 = vmatprep.mubr.bf16.mxu0 0
        %829 = vmatmul.mubr.bf16.gmra.mrb[0].mxu0 %v586
        %v830 = vpop.f32.mrb[0].mxu0
        %v831 = vadd.f32 %v640, %v830
        %v832 = vpop.f32.mrb[0].mxu0
        %v833 = vadd.f32 %v644, %v832
        %v834 = vpop.f32.mrb[0].mxu0
        %v835 = vadd.f32 %v640, %v834
        %v836 = vpop.f32.mrb[0].mxu0
        %v837 = vadd.f32 %v644, %v836
        %838 = vdwg.mxu0
        %839 = vmatprep.subr.bf16.mxu0 0
        %840 = vmatpush1.bf16.xpose.msra.mxu0 %v764
        %841 = vmatprep.subr.bf16.mxu0 0
        %842 = vmatpush1.bf16.xpose.msra.mxu0 %v765
        %843 = vmatprep.subr.bf16.mxu0 0
        %844 = vmatpush1.bf16.xpose.msra.mxu0 %v766
        %845 = vmatprep.subr.bf16.mxu0 0
        %846 = vmatpush1.bf16.xpose.msra.mxu0 %v767
        %847 = vmatprep.subr.bf16.mxu0 0
        %848 = vmatpush1.bf16.xpose.msra.mxu0 %v768
        %849 = vmatprep.subr.bf16.mxu0 0
        %850 = vmatpush1.bf16.xpose.msra.mxu0 %v769
        %851 = vmatprep.subr.bf16.mxu0 0
        %852 = vmatpush1.bf16.xpose.msra.mxu0 %v770
        %853 = vmatprep.subr.bf16.mxu0 0
        %854 = vmatpush1.bf16.xpose.msra.mxu0 %v771
        %855 = vmatprep.subr.bf16.mxu0 0
        %856 = vmatpush1.bf16.xpose.msra.mxu0 0
        %857 = vmatprep.subr.bf16.mxu0 0
        %858 = vmatpush1.bf16.xpose.msra.mxu0 0
        %859 = vmatprep.subr.bf16.mxu0 0
        %860 = vmatpush1.bf16.xpose.msra.mxu0 0
        %861 = vmatprep.subr.bf16.mxu0 0
        %862 = vmatpush1.bf16.xpose.msra.mxu0 0
        %863 = vmatprep.subr.bf16.mxu0 0
        %864 = vmatpush1.bf16.xpose.msra.mxu0 0
        %865 = vmatprep.subr.bf16.mxu0 0
        %866 = vmatpush1.bf16.xpose.msra.mxu0 0
        %867 = vmatprep.subr.bf16.mxu0 0
        %868 = vmatpush1.bf16.xpose.msra.mxu0 0
        %869 = vmatprep.subr.bf16.mxu0 0
        %870 = vmatpush1.bf16.xpose.msra.mxu0 0
        %871 = vmatprep.mubr.bf16.mxu0 0
        %872 = vmatmul.mubr.bf16.gmra.mrb[0].mxu0 %v586
        %v873 = vpop.f32.mrb[0].mxu0
        %v874 = vadd.f32 %v648, %v873
        %v875 = vpop.f32.mrb[0].mxu0
        %v876 = vpop.f32.mrb[0].mxu0
        %v877 = vadd.f32 %v648, %v876
        %v878 = vpop.f32.mrb[0].mxu0
        %879 = vdwg.mxu0
        %v880 = vpack.c.bf16 %v835, %v831
        %v881 = vpack.c.bf16 %v837, %v833
        %vm882 = vcmask 261120
        %v884 = vsel %vm882, %v880, 0
        %v887 = vsel %vm882, %v881, 0
        %889 = vmatprep.subr.bf16.mxu0 0
        %890 = vmatpush1.bf16.xpose.msra.mxu0 %v887
        %891 = vmatprep.subr.bf16.mxu0 0
        %892 = vmatpush1.bf16.xpose.msra.mxu0 0
        %893 = vmatprep.subr.bf16.mxu0 0
        %894 = vmatpush1.bf16.xpose.msra.mxu0 0
        %895 = vmatprep.subr.bf16.mxu0 0
        %896 = vmatpush1.bf16.xpose.msra.mxu0 0
        %897 = vmatprep.subr.bf16.mxu0 0
        %898 = vmatpush1.bf16.xpose.msra.mxu0 0
        %899 = vmatprep.subr.bf16.mxu0 0
        %900 = vmatpush1.bf16.xpose.msra.mxu0 0
        %901 = vmatprep.subr.bf16.mxu0 0
        %902 = vmatpush1.bf16.xpose.msra.mxu0 0
        %903 = vmatprep.subr.bf16.mxu0 0
        %904 = vmatpush1.bf16.xpose.msra.mxu0 0
        %905 = vmatprep.subr.bf16.mxu0 0
        %906 = vmatpush1.bf16.xpose.msra.mxu0 0
        %907 = vmatprep.subr.bf16.mxu0 0
        %908 = vmatpush1.bf16.xpose.msra.mxu0 0
        %909 = vmatprep.subr.bf16.mxu0 0
        %910 = vmatpush1.bf16.xpose.msra.mxu0 0
        %911 = vmatprep.subr.bf16.mxu0 0
        %912 = vmatpush1.bf16.xpose.msra.mxu0 0
        %913 = vmatprep.subr.bf16.mxu0 0
        %914 = vmatpush1.bf16.xpose.msra.mxu0 0
        %915 = vmatprep.subr.bf16.mxu0 0
        %916 = vmatpush1.bf16.xpose.msra.mxu0 0
        %917 = vmatprep.subr.bf16.mxu0 0
        %918 = vmatpush1.bf16.xpose.msra.mxu0 0
        %919 = vmatprep.subr.bf16.mxu0 0
        %920 = vmatpush1.bf16.xpose.msra.mxu0 0
        %921 = vmatprep.mubr.bf16.mxu0 0
        %922 = vmatmul.mubr.bf16.gmra.mrb[0].mxu0 %v884
        %v923 = vpop.f32.mrb[0].mxu0
        %v924 = vadd.f32 0.0, %v923
        %v925 = vpop.f32.mrb[0].mxu0
        %v926 = vpop.f32.mrb[0].mxu0
        %v927 = vadd.f32 0.0, %v926
        %v928 = vpop.f32.mrb[0].mxu0
        %929 = vdwg.mxu0
        %vm930 = vcmask 130048
        %v931 = vsel %vm930, %v924, -inf
        %932 = vmax.xlane.f32.xlu0 %v931
        %v933 = vpop.xlane.xlu0 %932
        %v934 = vsel %vm930, %v927, -inf
        %935 = vmax.xlane.f32.xlu0 %v934
        %v936 = vpop.xlane.xlu0 %935
        %v937 = vsub.f32 %v924, %v933
        %v938 = vsub.f32 %v927, %v936
        %v939 = vmul.f32 %v937, 1.442695
        %v940 = vpow.pop %v939
        %v941 = vmul.f32 %v938, 1.442695
        %v942 = vpow.pop %v941
        %v943 = vsel %vm930, %v940, 0.0
        %944 = vadd.xlane.f32.xlu0 %v943
        %v945 = vpop.xlane.xlu0 %944
        %v946 = vsel %vm930, %v942, 0.0
        %947 = vadd.xlane.f32.xlu0 %v946
        %v948 = vpop.xlane.xlu0 %947
        %v949 = vpack.c.bf16 %v942, %v940
        %v950 = vpack.c.bf16 %v877, %v874
        %v952 = vsel %vm930, %v949, 0
        %954 = vmatprep.subr.bf16.mxu0 0
        %955 = vmatpush1.bf16.msra.mxu0 %v950
        %956 = vmatprep.subr.bf16.mxu0 0
        %957 = vmatpush1.bf16.msra.mxu0 0
        %958 = vmatprep.subr.bf16.mxu0 0
        %959 = vmatpush1.bf16.msra.mxu0 0
        %960 = vmatprep.subr.bf16.mxu0 0
        %961 = vmatpush1.bf16.msra.mxu0 0
        %962 = vmatprep.subr.bf16.mxu0 0
        %963 = vmatpush1.bf16.msra.mxu0 0
        %964 = vmatprep.subr.bf16.mxu0 0
        %965 = vmatpush1.bf16.msra.mxu0 0
        %966 = vmatprep.subr.bf16.mxu0 0
        %967 = vmatpush1.bf16.msra.mxu0 0
        %968 = vmatprep.subr.bf16.mxu0 0
        %969 = vmatpush1.bf16.msra.mxu0 0
        %970 = vmatprep.subr.bf16.mxu0 0
        %971 = vmatpush1.bf16.msra.mxu0 0
        %972 = vmatprep.subr.bf16.mxu0 0
        %973 = vmatpush1.bf16.msra.mxu0 0
        %974 = vmatprep.subr.bf16.mxu0 0
        %975 = vmatpush1.bf16.msra.mxu0 0
        %976 = vmatprep.subr.bf16.mxu0 0
        %977 = vmatpush1.bf16.msra.mxu0 0
        %978 = vmatprep.subr.bf16.mxu0 0
        %979 = vmatpush1.bf16.msra.mxu0 0
        %980 = vmatprep.subr.bf16.mxu0 0
        %981 = vmatpush1.bf16.msra.mxu0 0
        %982 = vmatprep.subr.bf16.mxu0 0
        %983 = vmatpush1.bf16.msra.mxu0 0
        %984 = vmatprep.subr.bf16.mxu0 0
        %985 = vmatpush1.bf16.msra.mxu0 0
        %986 = vmatprep.mubr.bf16.mxu0 0
        %987 = vmatmul.mubr.bf16.gmra.mrb[0].mxu0 %v952
        %v988 = vpop.f32.mrb[0].mxu0
        %v989 = vadd.f32 0.0, %v988
        %v990 = vpop.f32.mrb[0].mxu0
        %v991 = vpop.f32.mrb[0].mxu0
        %v992 = vadd.f32 0.0, %v991
        %v993 = vpop.f32.mrb[0].mxu0
        %994 = vdwg.mxu0
        %v995 = vrcp.pop %v945
        %v996 = vrcp.pop %v948
        %v997 = vmul.f32 %v989, %v995
        %v998 = vmul.f32 %v992, %v996
        %999 = vst.msk [vmem:[#allocation2] sm:$0xff] %vm882, %v997
        %1000 = vst.msk [vmem:[#allocation2 + $0x8] sm:$0xff] %vm882, %v998
        %1002 = vrot.lane.b32.xlu0 %v880, 96
        %v1003 = vpop.permute.xlu0 %1002
        %1005 = vrot.lane.b32.xlu0 %v881, 96
        %v1006 = vpop.permute.xlu0 %1005
        %v1008 = vsel %vm882, %v1003, 0
        %v1011 = vsel %vm882, %v1006, 0
        %1013 = vmatprep.subr.bf16.mxu0 0
        %1014 = vmatpush1.bf16.xpose.msra.mxu0 %v1011
        %1015 = vmatprep.subr.bf16.mxu0 0
        %1016 = vmatpush1.bf16.xpose.msra.mxu0 0
        %1017 = vmatprep.subr.bf16.mxu0 0
        %1018 = vmatpush1.bf16.xpose.msra.mxu0 0
        %1019 = vmatprep.subr.bf16.mxu0 0
        %1020 = vmatpush1.bf16.xpose.msra.mxu0 0
        %1021 = vmatprep.subr.bf16.mxu0 0
        %1022 = vmatpush1.bf16.xpose.msra.mxu0 0
        %1023 = vmatprep.subr.bf16.mxu0 0
        %1024 = vmatpush1.bf16.xpose.msra.mxu0 0
        %1025 = vmatprep.subr.bf16.mxu0 0
        %1026 = vmatpush1.bf16.xpose.msra.mxu0 0
        %1027 = vmatprep.subr.bf16.mxu0 0
        %1028 = vmatpush1.bf16.xpose.msra.mxu0 0
        %1029 = vmatprep.subr.bf16.mxu0 0
        %1030 = vmatpush1.bf16.xpose.msra.mxu0 0
        %1031 = vmatprep.subr.bf16.mxu0 0
        %1032 = vmatpush1.bf16.xpose.msra.mxu0 0
        %1033 = vmatprep.subr.bf16.mxu0 0
        %1034 = vmatpush1.bf16.xpose.msra.mxu0 0
        %1035 = vmatprep.subr.bf16.mxu0 0
        %1036 = vmatpush1.bf16.xpose.msra.mxu0 0
        %1037 = vmatprep.subr.bf16.mxu0 0
        %1038 = vmatpush1.bf16.xpose.msra.mxu0 0
        %1039 = vmatprep.subr.bf16.mxu0 0
        %1040 = vmatpush1.bf16.xpose.msra.mxu0 0
        %1041 = vmatprep.subr.bf16.mxu0 0
        %1042 = vmatpush1.bf16.xpose.msra.mxu0 0
        %1043 = vmatprep.subr.bf16.mxu0 0
        %1044 = vmatpush1.bf16.xpose.msra.mxu0 0
        %1045 = vmatprep.mubr.bf16.mxu0 0
        %1046 = vmatmul.mubr.bf16.gmra.mrb[0].mxu0 %v1008
        %v1047 = vpop.f32.mrb[0].mxu0
        %v1048 = vadd.f32 0.0, %v1047
        %v1049 = vpop.f32.mrb[0].mxu0
        %v1050 = vpop.f32.mrb[0].mxu0
        %v1051 = vadd.f32 0.0, %v1050
        %v1052 = vpop.f32.mrb[0].mxu0
        %1053 = vdwg.mxu0
        %v1054 = vsel %vm930, %v1048, -inf
        %1055 = vmax.xlane.f32.xlu0 %v1054
        %v1056 = vpop.xlane.xlu0 %1055
        %v1057 = vsel %vm930, %v1051, -inf
        %1058 = vmax.xlane.f32.xlu0 %v1057
        %v1059 = vpop.xlane.xlu0 %1058
        %v1060 = vsub.f32 %v1048, %v1056
        %v1061 = vsub.f32 %v1051, %v1059
        %v1062 = vmul.f32 %v1060, 1.442695
        %v1063 = vpow.pop %v1062
        %v1064 = vmul.f32 %v1061, 1.442695
        %v1065 = vpow.pop %v1064
        %v1066 = vsel %vm930, %v1063, 0.0
        %1067 = vadd.xlane.f32.xlu0 %v1066
        %v1068 = vpop.xlane.xlu0 %1067
        %v1069 = vsel %vm930, %v1065, 0.0
        %1070 = vadd.xlane.f32.xlu0 %v1069
        %v1071 = vpop.xlane.xlu0 %1070
        %v1072 = vpack.c.bf16 %v1065, %v1063
        %1074 = vrot.lane.b32.xlu0 %v950, 96
        %v1075 = vpop.permute.xlu0 %1074
        %v1078 = vsel %vm930, %v1072, 0
        %1080 = vmatprep.subr.bf16.mxu0 0
        %1081 = vmatpush1.bf16.msra.mxu0 %v1075
        %1082 = vmatprep.subr.bf16.mxu0 0
        %1083 = vmatpush1.bf16.msra.mxu0 0
        %1084 = vmatprep.subr.bf16.mxu0 0
        %1085 = vmatpush1.bf16.msra.mxu0 0
        %1086 = vmatprep.subr.bf16.mxu0 0
        %1087 = vmatpush1.bf16.msra.mxu0 0
        %1088 = vmatprep.subr.bf16.mxu0 0
        %1089 = vmatpush1.bf16.msra.mxu0 0
        %1090 = vmatprep.subr.bf16.mxu0 0
        %1091 = vmatpush1.bf16.msra.mxu0 0
        %1092 = vmatprep.subr.bf16.mxu0 0
        %1093 = vmatpush1.bf16.msra.mxu0 0
        %1094 = vmatprep.subr.bf16.mxu0 0
        %1095 = vmatpush1.bf16.msra.mxu0 0
        %1096 = vmatprep.subr.bf16.mxu0 0
        %1097 = vmatpush1.bf16.msra.mxu0 0
        %1098 = vmatprep.subr.bf16.mxu0 0
        %1099 = vmatpush1.bf16.msra.mxu0 0
        %1100 = vmatprep.subr.bf16.mxu0 0
        %1101 = vmatpush1.bf16.msra.mxu0 0
        %1102 = vmatprep.subr.bf16.mxu0 0
        %1103 = vmatpush1.bf16.msra.mxu0 0
        %1104 = vmatprep.subr.bf16.mxu0 0
        %1105 = vmatpush1.bf16.msra.mxu0 0
        %1106 = vmatprep.subr.bf16.mxu0 0
        %1107 = vmatpush1.bf16.msra.mxu0 0
        %1108 = vmatprep.subr.bf16.mxu0 0
        %1109 = vmatpush1.bf16.msra.mxu0 0
        %1110 = vmatprep.subr.bf16.mxu0 0
        %1111 = vmatpush1.bf16.msra.mxu0 0
        %1112 = vmatprep.mubr.bf16.mxu0 0
        %1113 = vmatmul.mubr.bf16.gmra.mrb[0].mxu0 %v1078
        %v1114 = vpop.f32.mrb[0].mxu0
        %v1115 = vadd.f32 0.0, %v1114
        %v1116 = vpop.f32.mrb[0].mxu0
        %v1117 = vpop.f32.mrb[0].mxu0
        %v1118 = vadd.f32 0.0, %v1117
        %v1119 = vpop.f32.mrb[0].mxu0
        %1120 = vdwg.mxu0
        %v1121 = vrcp.pop %v1068
        %v1122 = vrcp.pop %v1071
        %v1123 = vmul.f32 %v1115, %v1121
        %v1124 = vmul.f32 %v1118, %v1122
        %1127 = vrot.lane.b32.xlu0 %v1123, 32
        %v1128 = vpop.permute.xlu0 %1127
        %1129 = vrot.lane.b32.xlu0 %v1124, 32
        %v1130 = vpop.permute.xlu0 %1129
        %vm1133 = vcmask 523520
        %1134 = vst.msk [vmem:[#allocation2] sm:$0xff] %vm1133, %v1128
        %1135 = vst.msk [vmem:[#allocation2 + $0x8] sm:$0xff] %vm1133, %v1130
        %1136 = vrot.lane.b32.xlu0 %v880, 64
        %v1137 = vpop.permute.xlu0 %1136
        %1138 = vrot.lane.b32.xlu0 %v881, 64
        %v1139 = vpop.permute.xlu0 %1138
        %v1141 = vsel %vm882, %v1137, 0
        %v1144 = vsel %vm882, %v1139, 0
        %1146 = vmatprep.subr.bf16.mxu0 0
        %1147 = vmatpush1.bf16.xpose.msra.mxu0 %v1144
        %1148 = vmatprep.subr.bf16.mxu0 0
        %1149 = vmatpush1.bf16.xpose.msra.mxu0 0
        %1150 = vmatprep.subr.bf16.mxu0 0
        %1151 = vmatpush1.bf16.xpose.msra.mxu0 0
        %1152 = vmatprep.subr.bf16.mxu0 0
        %1153 = vmatpush1.bf16.xpose.msra.mxu0 0
        %1154 = vmatprep.subr.bf16.mxu0 0
        %1155 = vmatpush1.bf16.xpose.msra.mxu0 0
        %1156 = vmatprep.subr.bf16.mxu0 0
        %1157 = vmatpush1.bf16.xpose.msra.mxu0 0
        %1158 = vmatprep.subr.bf16.mxu0 0
        %1159 = vmatpush1.bf16.xpose.msra.mxu0 0
        %1160 = vmatprep.subr.bf16.mxu0 0
        %1161 = vmatpush1.bf16.xpose.msra.mxu0 0
        %1162 = vmatprep.subr.bf16.mxu0 0
        %1163 = vmatpush1.bf16.xpose.msra.mxu0 0
        %1164 = vmatprep.subr.bf16.mxu0 0
        %1165 = vmatpush1.bf16.xpose.msra.mxu0 0
        %1166 = vmatprep.subr.bf16.mxu0 0
        %1167 = vmatpush1.bf16.xpose.msra.mxu0 0
        %1168 = vmatprep.subr.bf16.mxu0 0
        %1169 = vmatpush1.bf16.xpose.msra.mxu0 0
        %1170 = vmatprep.subr.bf16.mxu0 0
        %1171 = vmatpush1.bf16.xpose.msra.mxu0 0
        %1172 = vmatprep.subr.bf16.mxu0 0
        %1173 = vmatpush1.bf16.xpose.msra.mxu0 0
        %1174 = vmatprep.subr.bf16.mxu0 0
        %1175 = vmatpush1.bf16.xpose.msra.mxu0 0
        %1176 = vmatprep.subr.bf16.mxu0 0
        %1177 = vmatpush1.bf16.xpose.msra.mxu0 0
        %1178 = vmatprep.mubr.bf16.mxu0 0
        %1179 = vmatmul.mubr.bf16.gmra.mrb[0].mxu0 %v1141
        %v1180 = vpop.f32.mrb[0].mxu0
        %v1181 = vadd.f32 0.0, %v1180
        %v1182 = vpop.f32.mrb[0].mxu0
        %v1183 = vpop.f32.mrb[0].mxu0
        %v1184 = vadd.f32 0.0, %v1183
        %v1185 = vpop.f32.mrb[0].mxu0
        %1186 = vdwg.mxu0
        %v1187 = vsel %vm930, %v1181, -inf
        %1188 = vmax.xlane.f32.xlu0 %v1187
        %v1189 = vpop.xlane.xlu0 %1188
        %v1190 = vsel %vm930, %v1184, -inf
        %1191 = vmax.xlane.f32.xlu0 %v1190
        %v1192 = vpop.xlane.xlu0 %1191
        %v1193 = vsub.f32 %v1181, %v1189
        %v1194 = vsub.f32 %v1184, %v1192
        %v1195 = vmul.f32 %v1193, 1.442695
        %v1196 = vpow.pop %v1195
        %v1197 = vmul.f32 %v1194, 1.442695
        %v1198 = vpow.pop %v1197
        %v1199 = vsel %vm930, %v1196, 0.0
        %1200 = vadd.xlane.f32.xlu0 %v1199
        %v1201 = vpop.xlane.xlu0 %1200
        %v1202 = vsel %vm930, %v1198, 0.0
        %1203 = vadd.xlane.f32.xlu0 %v1202
        %v1204 = vpop.xlane.xlu0 %1203
        %v1205 = vpack.c.bf16 %v1198, %v1196
        %1206 = vrot.lane.b32.xlu0 %v950, 64
        %v1207 = vpop.permute.xlu0 %1206
        %v1210 = vsel %vm930, %v1205, 0
        %1212 = vmatprep.subr.bf16.mxu0 0
        %1213 = vmatpush1.bf16.msra.mxu0 %v1207
        %1214 = vmatprep.subr.bf16.mxu0 0
        %1215 = vmatpush1.bf16.msra.mxu0 0
        %1216 = vmatprep.subr.bf16.mxu0 0
        %1217 = vmatpush1.bf16.msra.mxu0 0
        %1218 = vmatprep.subr.bf16.mxu0 0
        %1219 = vmatpush1.bf16.msra.mxu0 0
        %1220 = vmatprep.subr.bf16.mxu0 0
        %1221 = vmatpush1.bf16.msra.mxu0 0
        %1222 = vmatprep.subr.bf16.mxu0 0
        %1223 = vmatpush1.bf16.msra.mxu0 0
        %1224 = vmatprep.subr.bf16.mxu0 0
        %1225 = vmatpush1.bf16.msra.mxu0 0
        %1226 = vmatprep.subr.bf16.mxu0 0
        %1227 = vmatpush1.bf16.msra.mxu0 0
        %1228 = vmatprep.subr.bf16.mxu0 0
        %1229 = vmatpush1.bf16.msra.mxu0 0
        %1230 = vmatprep.subr.bf16.mxu0 0
        %1231 = vmatpush1.bf16.msra.mxu0 0
        %1232 = vmatprep.subr.bf16.mxu0 0
        %1233 = vmatpush1.bf16.msra.mxu0 0
        %1234 = vmatprep.subr.bf16.mxu0 0
        %1235 = vmatpush1.bf16.msra.mxu0 0
        %1236 = vmatprep.subr.bf16.mxu0 0
        %1237 = vmatpush1.bf16.msra.mxu0 0
        %1238 = vmatprep.subr.bf16.mxu0 0
        %1239 = vmatpush1.bf16.msra.mxu0 0
        %1240 = vmatprep.subr.bf16.mxu0 0
        %1241 = vmatpush1.bf16.msra.mxu0 0
        %1242 = vmatprep.subr.bf16.mxu0 0
        %1243 = vmatpush1.bf16.msra.mxu0 0
        %1244 = vmatprep.mubr.bf16.mxu0 0
        %1245 = vmatmul.mubr.bf16.gmra.mrb[0].mxu0 %v1210
        %v1246 = vpop.f32.mrb[0].mxu0
        %v1247 = vadd.f32 0.0, %v1246
        %v1248 = vpop.f32.mrb[0].mxu0
        %v1249 = vpop.f32.mrb[0].mxu0
        %v1250 = vadd.f32 0.0, %v1249
        %v1251 = vpop.f32.mrb[0].mxu0
        %1252 = vdwg.mxu0
        %v1253 = vrcp.pop %v1201
        %v1254 = vrcp.pop %v1204
        %v1255 = vmul.f32 %v1247, %v1253
        %v1256 = vmul.f32 %v1250, %v1254
        %1259 = vrot.lane.b32.xlu0 %v1255, 64
        %v1260 = vpop.permute.xlu0 %1259
        %1261 = vrot.lane.b32.xlu0 %v1256, 64
        %v1262 = vpop.permute.xlu0 %1261
        %vm1265 = vcmask 785920
        %1266 = vst.msk [vmem:[#allocation2] sm:$0xff] %vm1265, %v1260
        %1267 = vst.msk [vmem:[#allocation2 + $0x8] sm:$0xff] %vm1265, %v1262
        %1268 = vrot.lane.b32.xlu0 %v880, 32
        %v1269 = vpop.permute.xlu0 %1268
        %1270 = vrot.lane.b32.xlu0 %v881, 32
        %v1271 = vpop.permute.xlu0 %1270
        %v1273 = vsel %vm882, %v1269, 0
        %v1276 = vsel %vm882, %v1271, 0
        %1278 = vmatprep.subr.bf16.mxu0 0
        %1279 = vmatpush1.bf16.xpose.msra.mxu0 %v1276
        %1280 = vmatprep.subr.bf16.mxu0 0
        %1281 = vmatpush1.bf16.xpose.msra.mxu0 0
        %1282 = vmatprep.subr.bf16.mxu0 0
        %1283 = vmatpush1.bf16.xpose.msra.mxu0 0
        %1284 = vmatprep.subr.bf16.mxu0 0
        %1285 = vmatpush1.bf16.xpose.msra.mxu0 0
        %1286 = vmatprep.subr.bf16.mxu0 0
        %1287 = vmatpush1.bf16.xpose.msra.mxu0 0
        %1288 = vmatprep.subr.bf16.mxu0 0
        %1289 = vmatpush1.bf16.xpose.msra.mxu0 0
        %1290 = vmatprep.subr.bf16.mxu0 0
        %1291 = vmatpush1.bf16.xpose.msra.mxu0 0
        %1292 = vmatprep.subr.bf16.mxu0 0
        %1293 = vmatpush1.bf16.xpose.msra.mxu0 0
        %1294 = vmatprep.subr.bf16.mxu0 0
        %1295 = vmatpush1.bf16.xpose.msra.mxu0 0
        %1296 = vmatprep.subr.bf16.mxu0 0
        %1297 = vmatpush1.bf16.xpose.msra.mxu0 0
        %1298 = vmatprep.subr.bf16.mxu0 0
        %1299 = vmatpush1.bf16.xpose.msra.mxu0 0
        %1300 = vmatprep.subr.bf16.mxu0 0
        %1301 = vmatpush1.bf16.xpose.msra.mxu0 0
        %1302 = vmatprep.subr.bf16.mxu0 0
        %1303 = vmatpush1.bf16.xpose.msra.mxu0 0
        %1304 = vmatprep.subr.bf16.mxu0 0
        %1305 = vmatpush1.bf16.xpose.msra.mxu0 0
        %1306 = vmatprep.subr.bf16.mxu0 0
        %1307 = vmatpush1.bf16.xpose.msra.mxu0 0
        %1308 = vmatprep.subr.bf16.mxu0 0
        %1309 = vmatpush1.bf16.xpose.msra.mxu0 0
        %1310 = vmatprep.mubr.bf16.mxu0 0
        %1311 = vmatmul.mubr.bf16.gmra.mrb[0].mxu0 %v1273
        %v1312 = vpop.f32.mrb[0].mxu0
        %v1313 = vadd.f32 0.0, %v1312
        %v1314 = vpop.f32.mrb[0].mxu0
        %v1315 = vpop.f32.mrb[0].mxu0
        %v1316 = vadd.f32 0.0, %v1315
        %v1317 = vpop.f32.mrb[0].mxu0
        %1318 = vdwg.mxu0
        %v1319 = vsel %vm930, %v1313, -inf
        %1320 = vmax.xlane.f32.xlu0 %v1319
        %v1321 = vpop.xlane.xlu0 %1320
        %v1322 = vsel %vm930, %v1316, -inf
        %1323 = vmax.xlane.f32.xlu0 %v1322
        %v1324 = vpop.xlane.xlu0 %1323
        %v1325 = vsub.f32 %v1313, %v1321
        %v1326 = vsub.f32 %v1316, %v1324
        %v1327 = vmul.f32 %v1325, 1.442695
        %v1328 = vpow.pop %v1327
        %v1329 = vmul.f32 %v1326, 1.442695
        %v1330 = vpow.pop %v1329
        %v1331 = vsel %vm930, %v1328, 0.0
        %1332 = vadd.xlane.f32.xlu0 %v1331
        %v1333 = vpop.xlane.xlu0 %1332
        %v1334 = vsel %vm930, %v1330, 0.0
        %1335 = vadd.xlane.f32.xlu0 %v1334
        %v1336 = vpop.xlane.xlu0 %1335
        %v1337 = vpack.c.bf16 %v1330, %v1328
        %1338 = vrot.lane.b32.xlu0 %v950, 32
        %v1339 = vpop.permute.xlu0 %1338
        %v1342 = vsel %vm930, %v1337, 0
        %1344 = vmatprep.subr.bf16.mxu0 0
        %1345 = vmatpush1.bf16.msra.mxu0 %v1339
        %1346 = vmatprep.subr.bf16.mxu0 0
        %1347 = vmatpush1.bf16.msra.mxu0 0
        %1348 = vmatprep.subr.bf16.mxu0 0
        %1349 = vmatpush1.bf16.msra.mxu0 0
        %1350 = vmatprep.subr.bf16.mxu0 0
        %1351 = vmatpush1.bf16.msra.mxu0 0
        %1352 = vmatprep.subr.bf16.mxu0 0
        %1353 = vmatpush1.bf16.msra.mxu0 0
        %1354 = vmatprep.subr.bf16.mxu0 0
        %1355 = vmatpush1.bf16.msra.mxu0 0
        %1356 = vmatprep.subr.bf16.mxu0 0
        %1357 = vmatpush1.bf16.msra.mxu0 0
        %1358 = vmatprep.subr.bf16.mxu0 0
        %1359 = vmatpush1.bf16.msra.mxu0 0
        %1360 = vmatprep.subr.bf16.mxu0 0
        %1361 = vmatpush1.bf16.msra.mxu0 0
        %1362 = vmatprep.subr.bf16.mxu0 0
        %1363 = vmatpush1.bf16.msra.mxu0 0
        %1364 = vmatprep.subr.bf16.mxu0 0
        %1365 = vmatpush1.bf16.msra.mxu0 0
        %1366 = vmatprep.subr.bf16.mxu0 0
        %1367 = vmatpush1.bf16.msra.mxu0 0
        %1368 = vmatprep.subr.bf16.mxu0 0
        %1369 = vmatpush1.bf16.msra.mxu0 0
        %1370 = vmatprep.subr.bf16.mxu0 0
        %1371 = vmatpush1.bf16.msra.mxu0 0
        %1372 = vmatprep.subr.bf16.mxu0 0
        %1373 = vmatpush1.bf16.msra.mxu0 0
        %1374 = vmatprep.subr.bf16.mxu0 0
        %1375 = vmatpush1.bf16.msra.mxu0 0
        %1376 = vmatprep.mubr.bf16.mxu0 0
        %1377 = vmatmul.mubr.bf16.gmra.mrb[0].mxu0 %v1342
        %v1378 = vpop.f32.mrb[0].mxu0
        %v1379 = vadd.f32 0.0, %v1378
        %v1380 = vpop.f32.mrb[0].mxu0
        %v1381 = vpop.f32.mrb[0].mxu0
        %v1382 = vadd.f32 0.0, %v1381
        %v1383 = vpop.f32.mrb[0].mxu0
        %1384 = vdwg.mxu0
        %v1385 = vrcp.pop %v1333
        %v1386 = vrcp.pop %v1336
        %v1387 = vmul.f32 %v1379, %v1385
        %v1388 = vmul.f32 %v1382, %v1386
        %1391 = vrot.lane.b32.xlu0 %v1387, 96
        %v1392 = vpop.permute.xlu0 %1391
        %1393 = vrot.lane.b32.xlu0 %v1388, 96
        %v1394 = vpop.permute.xlu0 %1393
        %vm1397 = vcmask 1048320
        %1398 = vst.msk [vmem:[#allocation2] sm:$0xff] %vm1397, %v1392
        %1399 = vst.msk [vmem:[#allocation2 + $0x8] sm:$0xff] %vm1397, %v1394
        %v1400 = vld [vmem:[#allocation2] sm:$0xff]
        %v1401 = vld [vmem:[#allocation2 + $0x8] sm:$0xff]
        %v1402 = vpack.c.bf16 %v1401, %v1400
        %v1403 = vld [vmem:[#allocation11] sm:$0xf]
        %v1404 = vld [vmem:[#allocation11 + $0x4] sm:$0xf]
        %v1405 = vld [vmem:[#allocation11 + $0x8] sm:$0xf]
        %v1406 = vld [vmem:[#allocation11 + $0xc] sm:$0xf]
        %v1407 = vld [vmem:[#allocation11 + $0x10] sm:$0xf]
        %v1408 = vld [vmem:[#allocation11 + $0x14] sm:$0xf]
        %v1409 = vld [vmem:[#allocation11 + $0x18] sm:$0xf]
        %v1410 = vld [vmem:[#allocation11 + $0x1c] sm:$0xf]
        %v1411 = vld [vmem:[#allocation11 + $0x20] sm:$0xf]
        %v1412 = vld [vmem:[#allocation11 + $0x24] sm:$0xf]
        %v1413 = vld [vmem:[#allocation11 + $0x28] sm:$0xf]
        %v1414 = vld [vmem:[#allocation11 + $0x2c] sm:$0xf]
        %v1415 = vld [vmem:[#allocation11 + $0x30] sm:$0xf]
        %v1416 = vld [vmem:[#allocation11 + $0x34] sm:$0xf]
        %v1417 = vld [vmem:[#allocation11 + $0x38] sm:$0xf]
        %v1418 = vld [vmem:[#allocation11 + $0x3c] sm:$0xf]
        %v1419 = vld [vmem:[%s6] sm:$0x1]
        %v1421 = vlaneseq
        %v1422 = vshrl.u32 %v1421, 7
        %v1423 = vsub.s32 0, %v1422
        %v1424 = vrot.slane %v1419, %v1423
        %v1442 = vunpack.c.l.b16 %v1403
        %v1443 = vunpack.c.l.b16 %v1404
        %v1444 = vunpack.c.l.b16 %v1405
        %v1445 = vunpack.c.l.b16 %v1406
        %v1446 = vunpack.c.l.b16 %v1407
        %v1447 = vunpack.c.l.b16 %v1408
        %v1448 = vunpack.c.l.b16 %v1409
        %v1449 = vunpack.c.l.b16 %v1410
        %v1450 = vunpack.c.l.b16 %v1411
        %v1451 = vunpack.c.l.b16 %v1412
        %v1452 = vunpack.c.l.b16 %v1413
        %v1453 = vunpack.c.l.b16 %v1414
        %v1454 = vunpack.c.l.b16 %v1415
        %v1455 = vunpack.c.l.b16 %v1416
        %v1456 = vunpack.c.l.b16 %v1417
        %v1457 = vunpack.c.l.b16 %v1418
        %v1458 = vpack.c.b16 %v1443, %v1442
        %v1459 = vpack.c.b16 %v1445, %v1444
        %v1460 = vpack.c.b16 %v1447, %v1446
        %v1461 = vpack.c.b16 %v1449, %v1448
        %v1462 = vpack.c.b16 %v1451, %v1450
        %v1463 = vpack.c.b16 %v1453, %v1452
        %v1464 = vpack.c.b16 %v1455, %v1454
        %v1465 = vpack.c.b16 %v1457, %v1456
        %1474 = vmatprep.subr.bf16.mxu0 0
        %1475 = vmatpush1.bf16.xpose.msra.mxu0 %v1458
        %1476 = vmatprep.subr.bf16.mxu0 0
        %1477 = vmatpush1.bf16.xpose.msra.mxu0 %v1459
        %1478 = vmatprep.subr.bf16.mxu0 0
        %1479 = vmatpush1.bf16.xpose.msra.mxu0 %v1460
        %1480 = vmatprep.subr.bf16.mxu0 0
        %1481 = vmatpush1.bf16.xpose.msra.mxu0 %v1461
        %1482 = vmatprep.subr.bf16.mxu0 0
        %1483 = vmatpush1.bf16.xpose.msra.mxu0 %v1462
        %1484 = vmatprep.subr.bf16.mxu0 0
        %1485 = vmatpush1.bf16.xpose.msra.mxu0 %v1463
        %1486 = vmatprep.subr.bf16.mxu0 0
        %1487 = vmatpush1.bf16.xpose.msra.mxu0 %v1464
        %1488 = vmatprep.subr.bf16.mxu0 0
        %1489 = vmatpush1.bf16.xpose.msra.mxu0 %v1465
        %1490 = vmatprep.subr.bf16.mxu0 0
        %1491 = vmatpush1.bf16.xpose.msra.mxu0 0
        %1492 = vmatprep.subr.bf16.mxu0 0
        %1493 = vmatpush1.bf16.xpose.msra.mxu0 0
        %1494 = vmatprep.subr.bf16.mxu0 0
        %1495 = vmatpush1.bf16.xpose.msra.mxu0 0
        %1496 = vmatprep.subr.bf16.mxu0 0
        %1497 = vmatpush1.bf16.xpose.msra.mxu0 0
        %1498 = vmatprep.subr.bf16.mxu0 0
        %1499 = vmatpush1.bf16.xpose.msra.mxu0 0
        %1500 = vmatprep.subr.bf16.mxu0 0
        %1501 = vmatpush1.bf16.xpose.msra.mxu0 0
        %1502 = vmatprep.subr.bf16.mxu0 0
        %1503 = vmatpush1.bf16.xpose.msra.mxu0 0
        %1504 = vmatprep.subr.bf16.mxu0 0
        %1505 = vmatpush1.bf16.xpose.msra.mxu0 0
        %1506 = vmatprep.mubr.bf16.mxu0 0
        %1507 = vmatmul.mubr.bf16.gmra.mrb[0].mxu0 %v1402
        %v1508 = vpop.f32.mrb[0].mxu0
        %v1509 = vadd.f32 %v1424, %v1508
        %v1510 = vpop.f32.mrb[0].mxu0
        %v1511 = vpop.f32.mrb[0].mxu0
        %v1512 = vadd.f32 %v1424, %v1511
        %v1513 = vpop.f32.mrb[0].mxu0
        %1514 = vdwg.mxu0
        %v1515 = vadd.f32 %v543, %v1509
        %v1516 = vadd.f32 %v544, %v1512
        %v1517 = vld [vmem:[%s7] sm:$0x1]
        %v1518 = vld [vmem:[%s8] sm:$0x1]
        %1519 = vadd.xlane.f32.xlu0 %v1515
        %v1520 = vpop.xlane.xlu0 %1519
        %1521 = vadd.xlane.f32.xlu0 %v1516
        %v1522 = vpop.xlane.xlu0 %1521
        %v1523 = vmul.f32 %v1520, %v551
        %v1524 = vmul.f32 %v1522, %v551
        %v1525 = vsub.f32 %v1515, %v1523
        %v1526 = vsub.f32 %v1516, %v1524
        %v1527 = vmul.f32 %v1525, %v1525
        %v1528 = vmul.f32 %v1526, %v1526
        %1529 = vadd.xlane.f32.xlu0 %v1527
        %v1530 = vpop.xlane.xlu0 %1529
        %1531 = vadd.xlane.f32.xlu0 %v1528
        %v1532 = vpop.xlane.xlu0 %1531
        %v1533 = vmul.f32 %v1530, %v551
        %v1534 = vmul.f32 %v1532, %v551
        %v1535 = vadd.f32 %v1533, 1e-06
        %v1536 = vadd.f32 %v1534, 1e-06
        %v1537 = vrsqrt.pop %v1535
        %v1538 = vrsqrt.pop %v1536
        %v1539 = vmul.f32 %v1525, %v1537
        %v1540 = vmul.f32 %v1526, %v1538
        %v1542 = vlaneseq
        %v1543 = vshrl.u32 %v1542, 7
        %v1544 = vsub.s32 0, %v1543
        %v1545 = vrot.slane %v1517, %v1544
        %v1547 = vmul.f32 %v1539, %v1545
        %v1548 = vmul.f32 %v1540, %v1545
        %v1550 = vlaneseq
        %v1551 = vshrl.u32 %v1550, 7
        %v1552 = vsub.s32 0, %v1551
        %v1553 = vrot.slane %v1518, %v1552
        %v1555 = vadd.f32 %v1547, %v1553
        %v1556 = vadd.f32 %v1548, %v1553
        %v1557 = vpack.c.bf16 %v1556, %v1555
        %v1558 = vld [vmem:[#allocation12] sm:$0xf]
        %v1559 = vld [vmem:[#allocation12 + $0x4] sm:$0xf]
        %v1560 = vld [vmem:[#allocation12 + $0x8] sm:$0xf]
        %v1561 = vld [vmem:[#allocation12 + $0xc] sm:$0xf]
        %v1562 = vld [vmem:[#allocation12 + $0x10] sm:$0xf]
        %v1563 = vld [vmem:[#allocation12 + $0x14] sm:$0xf]
        %v1564 = vld [vmem:[#allocation12 + $0x18] sm:$0xf]
        %v1565 = vld [vmem:[#allocation12 + $0x1c] sm:$0xf]
        %v1566 = vld [vmem:[#allocation12 + $0x20] sm:$0xf]
        %v1567 = vld [vmem:[#allocation12 + $0x24] sm:$0xf]
        %v1568 = vld [vmem:[#allocation12 + $0x28] sm:$0xf]
        %v1569 = vld [vmem:[#allocation12 + $0x2c] sm:$0xf]
        %v1570 = vld [vmem:[#allocation12 + $0x30] sm:$0xf]
        %v1571 = vld [vmem:[#allocation12 + $0x34] sm:$0xf]
        %v1572 = vld [vmem:[#allocation12 + $0x38] sm:$0xf]
        %v1573 = vld [vmem:[#allocation12 + $0x3c] sm:$0xf]
        %v1574 = vld [vmem:[#allocation12 + $0x40] sm:$0xf]
        %v1575 = vld [vmem:[#allocation12 + $0x44] sm:$0xf]
        %v1576 = vld [vmem:[#allocation12 + $0x48] sm:$0xf]
        %v1577 = vld [vmem:[#allocation12 + $0x4c] sm:$0xf]
        %v1578 = vld [vmem:[#allocation12 + $0x50] sm:$0xf]
        %v1579 = vld [vmem:[#allocation12 + $0x54] sm:$0xf]
        %v1580 = vld [vmem:[#allocation12 + $0x58] sm:$0xf]
        %v1581 = vld [vmem:[#allocation12 + $0x5c] sm:$0xf]
        %v1582 = vld [vmem:[#allocation12 + $0x60] sm:$0xf]
        %v1583 = vld [vmem:[#allocation12 + $0x64] sm:$0xf]
        %v1584 = vld [vmem:[#allocation12 + $0x68] sm:$0xf]
        %v1585 = vld [vmem:[#allocation12 + $0x6c] sm:$0xf]
        %v1586 = vld [vmem:[#allocation12 + $0x70] sm:$0xf]
        %v1587 = vld [vmem:[#allocation12 + $0x74] sm:$0xf]
        %v1588 = vld [vmem:[#allocation12 + $0x78] sm:$0xf]
        %v1589 = vld [vmem:[#allocation12 + $0x7c] sm:$0xf]
        %v1590 = vld [vmem:[#allocation12 + $0x80] sm:$0xf]
        %v1591 = vld [vmem:[#allocation12 + $0x84] sm:$0xf]
        %v1592 = vld [vmem:[#allocation12 + $0x88] sm:$0xf]
        %v1593 = vld [vmem:[#allocation12 + $0x8c] sm:$0xf]
        %v1594 = vld [vmem:[#allocation12 + $0x90] sm:$0xf]
        %v1595 = vld [vmem:[#allocation12 + $0x94] sm:$0xf]
        %v1596 = vld [vmem:[#allocation12 + $0x98] sm:$0xf]
        %v1597 = vld [vmem:[#allocation12 + $0x9c] sm:$0xf]
        %v1598 = vld [vmem:[#allocation12 + $0xa0] sm:$0xf]
        %v1599 = vld [vmem:[#allocation12 + $0xa4] sm:$0xf]
        %v1600 = vld [vmem:[#allocation12 + $0xa8] sm:$0xf]
        %v1601 = vld [vmem:[#allocation12 + $0xac] sm:$0xf]
        %v1602 = vld [vmem:[#allocation12 + $0xb0] sm:$0xf]
        %v1603 = vld [vmem:[#allocation12 + $0xb4] sm:$0xf]
        %v1604 = vld [vmem:[#allocation12 + $0xb8] sm:$0xf]
        %v1605 = vld [vmem:[#allocation12 + $0xbc] sm:$0xf]
        %v1606 = vld [vmem:[#allocation12 + $0xc0] sm:$0xf]
        %v1607 = vld [vmem:[#allocation12 + $0xc4] sm:$0xf]
        %v1608 = vld [vmem:[#allocation12 + $0xc8] sm:$0xf]
        %v1609 = vld [vmem:[#allocation12 + $0xcc] sm:$0xf]
        %v1610 = vld [vmem:[#allocation12 + $0xd0] sm:$0xf]
        %v1611 = vld [vmem:[#allocation12 + $0xd4] sm:$0xf]
        %v1612 = vld [vmem:[#allocation12 + $0xd8] sm:$0xf]
        %v1613 = vld [vmem:[#allocation12 + $0xdc] sm:$0xf]
        %v1614 = vld [vmem:[#allocation12 + $0xe0] sm:$0xf]
        %v1615 = vld [vmem:[#allocation12 + $0xe4] sm:$0xf]
        %v1616 = vld [vmem:[#allocation12 + $0xe8] sm:$0xf]
        %v1617 = vld [vmem:[#allocation12 + $0xec] sm:$0xf]
        %v1618 = vld [vmem:[#allocation12 + $0xf0] sm:$0xf]
        %v1619 = vld [vmem:[#allocation12 + $0xf4] sm:$0xf]
        %v1620 = vld [vmem:[#allocation12 + $0xf8] sm:$0xf]
        %v1621 = vld [vmem:[#allocation12 + $0xfc] sm:$0xf]
        %v1622 = vld [vmem:[%s10] sm:$0xf]
        %v1624 = vlaneseq
        %v1625 = vshrl.u32 %v1624, 7
        %v1626 = vsub.s32 0, %v1625
        %v1627 = vrot.slane %v1622, %v1626
        %v1628 = vlaneseq
        %v1629 = vshrl.u32 %v1628, 7
        %v1630 = vsub.s32 1, %v1629
        %v1631 = vrot.slane %v1622, %v1630
        %v1632 = vlaneseq
        %v1633 = vshrl.u32 %v1632, 7
        %v1634 = vsub.s32 2, %v1633
        %v1635 = vrot.slane %v1622, %v1634
        %v1636 = vlaneseq
        %v1637 = vshrl.u32 %v1636, 7
        %v1638 = vsub.s32 3, %v1637
        %v1639 = vrot.slane %v1622, %v1638
        %v1708 = vunpack.c.l.b16 %v1558
        %v1709 = vunpack.c.l.b16 %v1559
        %v1710 = vunpack.c.l.b16 %v1560
        %v1711 = vunpack.c.l.b16 %v1561
        %v1712 = vunpack.c.l.b16 %v1562
        %v1713 = vunpack.c.l.b16 %v1563
        %v1714 = vunpack.c.l.b16 %v1564
        %v1715 = vunpack.c.l.b16 %v1565
        %v1716 = vunpack.c.l.b16 %v1566
        %v1717 = vunpack.c.l.b16 %v1567
        %v1718 = vunpack.c.l.b16 %v1568
        %v1719 = vunpack.c.l.b16 %v1569
        %v1720 = vunpack.c.l.b16 %v1570
        %v1721 = vunpack.c.l.b16 %v1571
        %v1722 = vunpack.c.l.b16 %v1572
        %v1723 = vunpack.c.l.b16 %v1573
        %v1724 = vunpack.c.l.b16 %v1574
        %v1725 = vunpack.c.l.b16 %v1575
        %v1726 = vunpack.c.l.b16 %v1576
        %v1727 = vunpack.c.l.b16 %v1577
        %v1728 = vunpack.c.l.b16 %v1578
        %v1729 = vunpack.c.l.b16 %v1579
        %v1730 = vunpack.c.l.b16 %v1580
        %v1731 = vunpack.c.l.b16 %v1581
        %v1732 = vunpack.c.l.b16 %v1582
        %v1733 = vunpack.c.l.b16 %v1583
        %v1734 = vunpack.c.l.b16 %v1584
        %v1735 = vunpack.c.l.b16 %v1585
        %v1736 = vunpack.c.l.b16 %v1586
        %v1737 = vunpack.c.l.b16 %v1587
        %v1738 = vunpack.c.l.b16 %v1588
        %v1739 = vunpack.c.l.b16 %v1589
        %v1740 = vunpack.c.l.b16 %v1590
        %v1741 = vunpack.c.l.b16 %v1591
        %v1742 = vunpack.c.l.b16 %v1592
        %v1743 = vunpack.c.l.b16 %v1593
        %v1744 = vunpack.c.l.b16 %v1594
        %v1745 = vunpack.c.l.b16 %v1595
        %v1746 = vunpack.c.l.b16 %v1596
        %v1747 = vunpack.c.l.b16 %v1597
        %v1748 = vunpack.c.l.b16 %v1598
        %v1749 = vunpack.c.l.b16 %v1599
        %v1750 = vunpack.c.l.b16 %v1600
        %v1751 = vunpack.c.l.b16 %v1601
        %v1752 = vunpack.c.l.b16 %v1602
        %v1753 = vunpack.c.l.b16 %v1603
        %v1754 = vunpack.c.l.b16 %v1604
        %v1755 = vunpack.c.l.b16 %v1605
        %v1756 = vunpack.c.l.b16 %v1606
        %v1757 = vunpack.c.l.b16 %v1607
        %v1758 = vunpack.c.l.b16 %v1608
        %v1759 = vunpack.c.l.b16 %v1609
        %v1760 = vunpack.c.l.b16 %v1610
        %v1761 = vunpack.c.l.b16 %v1611
        %v1762 = vunpack.c.l.b16 %v1612
        %v1763 = vunpack.c.l.b16 %v1613
        %v1764 = vunpack.c.l.b16 %v1614
        %v1765 = vunpack.c.l.b16 %v1615
        %v1766 = vunpack.c.l.b16 %v1616
        %v1767 = vunpack.c.l.b16 %v1617
        %v1768 = vunpack.c.l.b16 %v1618
        %v1769 = vunpack.c.l.b16 %v1619
        %v1770 = vunpack.c.l.b16 %v1620
        %v1771 = vunpack.c.l.b16 %v1621
        %v1772 = vpack.c.b16 %v1709, %v1708
        %v1773 = vpack.c.b16 %v1711, %v1710
        %v1774 = vpack.c.b16 %v1713, %v1712
        %v1775 = vpack.c.b16 %v1715, %v1714
        %v1776 = vpack.c.b16 %v1717, %v1716
        %v1777 = vpack.c.b16 %v1719, %v1718
        %v1778 = vpack.c.b16 %v1721, %v1720
        %v1779 = vpack.c.b16 %v1723, %v1722
        %v1780 = vpack.c.b16 %v1725, %v1724
        %v1781 = vpack.c.b16 %v1727, %v1726
        %v1782 = vpack.c.b16 %v1729, %v1728
        %v1783 = vpack.c.b16 %v1731, %v1730
        %v1784 = vpack.c.b16 %v1733, %v1732
        %v1785 = vpack.c.b16 %v1735, %v1734
        %v1786 = vpack.c.b16 %v1737, %v1736
        %v1787 = vpack.c.b16 %v1739, %v1738
        %v1788 = vpack.c.b16 %v1741, %v1740
        %v1789 = vpack.c.b16 %v1743, %v1742
        %v1790 = vpack.c.b16 %v1745, %v1744
        %v1791 = vpack.c.b16 %v1747, %v1746
        %v1792 = vpack.c.b16 %v1749, %v1748
        %v1793 = vpack.c.b16 %v1751, %v1750
        %v1794 = vpack.c.b16 %v1753, %v1752
        %v1795 = vpack.c.b16 %v1755, %v1754
        %v1796 = vpack.c.b16 %v1757, %v1756
        %v1797 = vpack.c.b16 %v1759, %v1758
        %v1798 = vpack.c.b16 %v1761, %v1760
        %v1799 = vpack.c.b16 %v1763, %v1762
        %v1800 = vpack.c.b16 %v1765, %v1764
        %v1801 = vpack.c.b16 %v1767, %v1766
        %v1802 = vpack.c.b16 %v1769, %v1768
        %v1803 = vpack.c.b16 %v1771, %v1770
        %1836 = vmatprep.subr.bf16.mxu0 0
        %1837 = vmatpush1.bf16.xpose.msra.mxu0 %v1772
        %1838 = vmatprep.subr.bf16.mxu0 0
        %1839 = vmatpush1.bf16.xpose.msra.mxu0 %v1773
        %1840 = vmatprep.subr.bf16.mxu0 0
        %1841 = vmatpush1.bf16.xpose.msra.mxu0 %v1774
        %1842 = vmatprep.subr.bf16.mxu0 0
        %1843 = vmatpush1.bf16.xpose.msra.mxu0 %v1775
        %1844 = vmatprep.subr.bf16.mxu0 0
        %1845 = vmatpush1.bf16.xpose.msra.mxu0 %v1776
        %1846 = vmatprep.subr.bf16.mxu0 0
        %1847 = vmatpush1.bf16.xpose.msra.mxu0 %v1777
        %1848 = vmatprep.subr.bf16.mxu0 0
        %1849 = vmatpush1.bf16.xpose.msra.mxu0 %v1778
        %1850 = vmatprep.subr.bf16.mxu0 0
        %1851 = vmatpush1.bf16.xpose.msra.mxu0 %v1779
        %1852 = vmatprep.subr.bf16.mxu0 0
        %1853 = vmatpush1.bf16.xpose.msra.mxu0 %v1780
        %1854 = vmatprep.subr.bf16.mxu0 0
        %1855 = vmatpush1.bf16.xpose.msra.mxu0 %v1781
        %1856 = vmatprep.subr.bf16.mxu0 0
        %1857 = vmatpush1.bf16.xpose.msra.mxu0 %v1782
        %1858 = vmatprep.subr.bf16.mxu0 0
        %1859 = vmatpush1.bf16.xpose.msra.mxu0 %v1783
        %1860 = vmatprep.subr.bf16.mxu0 0
        %1861 = vmatpush1.bf16.xpose.msra.mxu0 %v1784
        %1862 = vmatprep.subr.bf16.mxu0 0
        %1863 = vmatpush1.bf16.xpose.msra.mxu0 %v1785
        %1864 = vmatprep.subr.bf16.mxu0 0
        %1865 = vmatpush1.bf16.xpose.msra.mxu0 %v1786
        %1866 = vmatprep.subr.bf16.mxu0 0
        %1867 = vmatpush1.bf16.xpose.msra.mxu0 %v1787
        %1868 = vmatprep.mubr.bf16.mxu0 0
        %1869 = vmatmul.mubr.bf16.gmra.mrb[0].mxu0 %v1557
        %v1870 = vpop.f32.mrb[0].mxu0
        %v1871 = vadd.f32 %v1627, %v1870
        %v1872 = vpop.f32.mrb[0].mxu0
        %v1873 = vadd.f32 %v1631, %v1872
        %v1874 = vpop.f32.mrb[0].mxu0
        %v1875 = vadd.f32 %v1627, %v1874
        %v1876 = vpop.f32.mrb[0].mxu0
        %v1877 = vadd.f32 %v1631, %v1876
        %1878 = vdwg.mxu0
        %1879 = vmatprep.subr.bf16.mxu0 0
        %1880 = vmatpush1.bf16.xpose.msra.mxu0 %v1788
        %1881 = vmatprep.subr.bf16.mxu0 0
        %1882 = vmatpush1.bf16.xpose.msra.mxu0 %v1789
        %1883 = vmatprep.subr.bf16.mxu0 0
        %1884 = vmatpush1.bf16.xpose.msra.mxu0 %v1790
        %1885 = vmatprep.subr.bf16.mxu0 0
        %1886 = vmatpush1.bf16.xpose.msra.mxu0 %v1791
        %1887 = vmatprep.subr.bf16.mxu0 0
        %1888 = vmatpush1.bf16.xpose.msra.mxu0 %v1792
        %1889 = vmatprep.subr.bf16.mxu0 0
        %1890 = vmatpush1.bf16.xpose.msra.mxu0 %v1793
        %1891 = vmatprep.subr.bf16.mxu0 0
        %1892 = vmatpush1.bf16.xpose.msra.mxu0 %v1794
        %1893 = vmatprep.subr.bf16.mxu0 0
        %1894 = vmatpush1.bf16.xpose.msra.mxu0 %v1795
        %1895 = vmatprep.subr.bf16.mxu0 0
        %1896 = vmatpush1.bf16.xpose.msra.mxu0 %v1796
        %1897 = vmatprep.subr.bf16.mxu0 0
        %1898 = vmatpush1.bf16.xpose.msra.mxu0 %v1797
        %1899 = vmatprep.subr.bf16.mxu0 0
        %1900 = vmatpush1.bf16.xpose.msra.mxu0 %v1798
        %1901 = vmatprep.subr.bf16.mxu0 0
        %1902 = vmatpush1.bf16.xpose.msra.mxu0 %v1799
        %1903 = vmatprep.subr.bf16.mxu0 0
        %1904 = vmatpush1.bf16.xpose.msra.mxu0 %v1800
        %1905 = vmatprep.subr.bf16.mxu0 0
        %1906 = vmatpush1.bf16.xpose.msra.mxu0 %v1801
        %1907 = vmatprep.subr.bf16.mxu0 0
        %1908 = vmatpush1.bf16.xpose.msra.mxu0 %v1802
        %1909 = vmatprep.subr.bf16.mxu0 0
        %1910 = vmatpush1.bf16.xpose.msra.mxu0 %v1803
        %1911 = vmatprep.mubr.bf16.mxu0 0
        %1912 = vmatmul.mubr.bf16.gmra.mrb[0].mxu0 %v1557
        %v1913 = vpop.f32.mrb[0].mxu0
        %v1914 = vadd.f32 %v1635, %v1913
        %v1915 = vpop.f32.mrb[0].mxu0
        %v1916 = vadd.f32 %v1639, %v1915
        %v1917 = vpop.f32.mrb[0].mxu0
        %v1918 = vadd.f32 %v1635, %v1917
        %v1919 = vpop.f32.mrb[0].mxu0
        %v1920 = vadd.f32 %v1639, %v1919
        %1921 = vdwg.mxu0
        %v1922 = vmul.f32 %v1871, 0.5
        %v1923 = vmul.f32 %v1873, 0.5
        %v1924 = vmul.f32 %v1914, 0.5
        %v1925 = vmul.f32 %v1916, 0.5
        %v1926 = vmul.f32 %v1875, 0.5
        %v1927 = vmul.f32 %v1877, 0.5
        %v1928 = vmul.f32 %v1918, 0.5
        %v1929 = vmul.f32 %v1920, 0.5
        %v1930 = vmul.f32 %v1871, 0.70710677
        %v1931 = vmul.f32 %v1873, 0.70710677
        %v1932 = vmul.f32 %v1914, 0.70710677
        %v1933 = vmul.f32 %v1916, 0.70710677
        %v1934 = vmul.f32 %v1875, 0.70710677
        %v1935 = vmul.f32 %v1877, 0.70710677
        %v1936 = vmul.f32 %v1918, 0.70710677
        %v1937 = vmul.f32 %v1920, 0.70710677
        %v1938 = verf.f32.pop %v1930
        %v1939 = verf.f32.pop %v1931
        %v1940 = verf.f32.pop %v1932
        %v1941 = verf.f32.pop %v1933
        %v1942 = verf.f32.pop %v1934
        %v1943 = verf.f32.pop %v1935
        %v1944 = verf.f32.pop %v1936
        %v1945 = verf.f32.pop %v1937
        %v1946 = vadd.f32 %v1938, 1.0
        %v1947 = vadd.f32 %v1939, 1.0
        %v1948 = vadd.f32 %v1940, 1.0
        %v1949 = vadd.f32 %v1941, 1.0
        %v1950 = vadd.f32 %v1942, 1.0
        %v1951 = vadd.f32 %v1943, 1.0
        %v1952 = vadd.f32 %v1944, 1.0
        %v1953 = vadd.f32 %v1945, 1.0
        %v1954 = vmul.f32 %v1922, %v1946
        %v1955 = vmul.f32 %v1923, %v1947
        %v1956 = vmul.f32 %v1924, %v1948
        %v1957 = vmul.f32 %v1925, %v1949
        %v1958 = vmul.f32 %v1926, %v1950
        %v1959 = vmul.f32 %v1927, %v1951
        %v1960 = vmul.f32 %v1928, %v1952
        %v1961 = vmul.f32 %v1929, %v1953
        %v1962 = vpack.c.bf16 %v1958, %v1954
        %v1963 = vpack.c.bf16 %v1959, %v1955
        %v1964 = vpack.c.bf16 %v1960, %v1956
        %v1965 = vpack.c.bf16 %v1961, %v1957
        %v1966 = vld [vmem:[#allocation14] sm:$0xff]
        %v1967 = vld [vmem:[#allocation14 + $0x8] sm:$0xff]
        %v1968 = vld [vmem:[#allocation14 + $0x10] sm:$0xff]
        %v1969 = vld [vmem:[#allocation14 + $0x18] sm:$0xff]
        %v1970 = vld [vmem:[#allocation14 + $0x20] sm:$0xff]
        %v1971 = vld [vmem:[#allocation14 + $0x28] sm:$0xff]
        %v1972 = vld [vmem:[#allocation14 + $0x30] sm:$0xff]
        %v1973 = vld [vmem:[#allocation14 + $0x38] sm:$0xff]
        %v1974 = vld [vmem:[#allocation14 + $0x40] sm:$0xff]
        %v1975 = vld [vmem:[#allocation14 + $0x48] sm:$0xff]
        %v1976 = vld [vmem:[#allocation14 + $0x50] sm:$0xff]
        %v1977 = vld [vmem:[#allocation14 + $0x58] sm:$0xff]
        %v1978 = vld [vmem:[#allocation14 + $0x60] sm:$0xff]
        %v1979 = vld [vmem:[#allocation14 + $0x68] sm:$0xff]
        %v1980 = vld [vmem:[#allocation14 + $0x70] sm:$0xff]
        %v1981 = vld [vmem:[#allocation14 + $0x78] sm:$0xff]
        %v1982 = vld [vmem:[#allocation14 + $0x80] sm:$0xff]
        %v1983 = vld [vmem:[#allocation14 + $0x88] sm:$0xff]
        %v1984 = vld [vmem:[#allocation14 + $0x90] sm:$0xff]
        %v1985 = vld [vmem:[#allocation14 + $0x98] sm:$0xff]
        %v1986 = vld [vmem:[#allocation14 + $0xa0] sm:$0xff]
        %v1987 = vld [vmem:[#allocation14 + $0xa8] sm:$0xff]
        %v1988 = vld [vmem:[#allocation14 + $0xb0] sm:$0xff]
        %v1989 = vld [vmem:[#allocation14 + $0xb8] sm:$0xff]
        %v1990 = vld [vmem:[#allocation14 + $0xc0] sm:$0xff]
        %v1991 = vld [vmem:[#allocation14 + $0xc8] sm:$0xff]
        %v1992 = vld [vmem:[#allocation14 + $0xd0] sm:$0xff]
        %v1993 = vld [vmem:[#allocation14 + $0xd8] sm:$0xff]
        %v1994 = vld [vmem:[#allocation14 + $0xe0] sm:$0xff]
        %v1995 = vld [vmem:[#allocation14 + $0xe8] sm:$0xff]
        %v1996 = vld [vmem:[#allocation14 + $0xf0] sm:$0xff]
        %v1997 = vld [vmem:[#allocation14 + $0xf8] sm:$0xff]
        %v1998 = vld [vmem:[%s12] sm:$0x1]
        %v2000 = vlaneseq
        %v2001 = vshrl.u32 %v2000, 7
        %v2002 = vsub.s32 0, %v2001
        %v2003 = vrot.slane %v1998, %v2002
        %v2037 = vunpack.c.l.b16 %v1966
        %v2038 = vunpack.c.h.b16 %v1966
        %v2039 = vunpack.c.l.b16 %v1967
        %v2040 = vunpack.c.h.b16 %v1967
        %v2041 = vunpack.c.l.b16 %v1968
        %v2042 = vunpack.c.h.b16 %v1968
        %v2043 = vunpack.c.l.b16 %v1969
        %v2044 = vunpack.c.h.b16 %v1969
        %v2045 = vunpack.c.l.b16 %v1970
        %v2046 = vunpack.c.h.b16 %v1970
        %v2047 = vunpack.c.l.b16 %v1971
        %v2048 = vunpack.c.h.b16 %v1971
        %v2049 = vunpack.c.l.b16 %v1972
        %v2050 = vunpack.c.h.b16 %v1972
        %v2051 = vunpack.c.l.b16 %v1973
        %v2052 = vunpack.c.h.b16 %v1973
        %v2053 = vunpack.c.l.b16 %v1974
        %v2054 = vunpack.c.h.b16 %v1974
        %v2055 = vunpack.c.l.b16 %v1975
        %v2056 = vunpack.c.h.b16 %v1975
        %v2057 = vunpack.c.l.b16 %v1976
        %v2058 = vunpack.c.h.b16 %v1976
        %v2059 = vunpack.c.l.b16 %v1977
        %v2060 = vunpack.c.h.b16 %v1977
        %v2061 = vunpack.c.l.b16 %v1978
        %v2062 = vunpack.c.h.b16 %v1978
        %v2063 = vunpack.c.l.b16 %v1979
        %v2064 = vunpack.c.h.b16 %v1979
        %v2065 = vunpack.c.l.b16 %v1980
        %v2066 = vunpack.c.h.b16 %v1980
        %v2067 = vunpack.c.l.b16 %v1981
        %v2068 = vunpack.c.h.b16 %v1981
        %v2069 = vunpack.c.l.b16 %v1982
        %v2070 = vunpack.c.h.b16 %v1982
        %v2071 = vunpack.c.l.b16 %v1983
        %v2072 = vunpack.c.h.b16 %v1983
        %v2073 = vunpack.c.l.b16 %v1984
        %v2074 = vunpack.c.h.b16 %v1984
        %v2075 = vunpack.c.l.b16 %v1985
        %v2076 = vunpack.c.h.b16 %v1985
        %v2077 = vunpack.c.l.b16 %v1986
        %v2078 = vunpack.c.h.b16 %v1986
        %v2079 = vunpack.c.l.b16 %v1987
        %v2080 = vunpack.c.h.b16 %v1987
        %v2081 = vunpack.c.l.b16 %v1988
        %v2082 = vunpack.c.h.b16 %v1988
        %v2083 = vunpack.c.l.b16 %v1989
        %v2084 = vunpack.c.h.b16 %v1989
        %v2085 = vunpack.c.l.b16 %v1990
        %v2086 = vunpack.c.h.b16 %v1990
        %v2087 = vunpack.c.l.b16 %v1991
        %v2088 = vunpack.c.h.b16 %v1991
        %v2089 = vunpack.c.l.b16 %v1992
        %v2090 = vunpack.c.h.b16 %v1992
        %v2091 = vunpack.c.l.b16 %v1993
        %v2092 = vunpack.c.h.b16 %v1993
        %v2093 = vunpack.c.l.b16 %v1994
        %v2094 = vunpack.c.h.b16 %v1994
        %v2095 = vunpack.c.l.b16 %v1995
        %v2096 = vunpack.c.h.b16 %v1995
        %v2097 = vunpack.c.l.b16 %v1996
        %v2098 = vunpack.c.h.b16 %v1996
        %v2099 = vunpack.c.l.b16 %v1997
        %v2100 = vunpack.c.h.b16 %v1997
        %v2101 = vpack.c.b16 %v2041, %v2037
        %v2102 = vpack.c.b16 %v2042, %v2038
        %v2103 = vpack.c.b16 %v2043, %v2039
        %v2104 = vpack.c.b16 %v2044, %v2040
        %v2105 = vpack.c.b16 %v2049, %v2045
        %v2106 = vpack.c.b16 %v2050, %v2046
        %v2107 = vpack.c.b16 %v2051, %v2047
        %v2108 = vpack.c.b16 %v2052, %v2048
        %v2109 = vpack.c.b16 %v2057, %v2053
        %v2110 = vpack.c.b16 %v2058, %v2054
        %v2111 = vpack.c.b16 %v2059, %v2055
        %v2112 = vpack.c.b16 %v2060, %v2056
        %v2113 = vpack.c.b16 %v2065, %v2061
        %v2114 = vpack.c.b16 %v2066, %v2062
        %v2115 = vpack.c.b16 %v2067, %v2063
        %v2116 = vpack.c.b16 %v2068, %v2064
        %v2117 = vpack.c.b16 %v2073, %v2069
        %v2118 = vpack.c.b16 %v2074, %v2070
        %v2119 = vpack.c.b16 %v2075, %v2071
        %v2120 = vpack.c.b16 %v2076, %v2072
        %v2121 = vpack.c.b16 %v2081, %v2077
        %v2122 = vpack.c.b16 %v2082, %v2078
        %v2123 = vpack.c.b16 %v2083, %v2079
        %v2124 = vpack.c.b16 %v2084, %v2080
        %v2125 = vpack.c.b16 %v2089, %v2085
        %v2126 = vpack.c.b16 %v2090, %v2086
        %v2127 = vpack.c.b16 %v2091, %v2087
        %v2128 = vpack.c.b16 %v2092, %v2088
        %v2129 = vpack.c.b16 %v2097, %v2093
        %v2130 = vpack.c.b16 %v2098, %v2094
        %v2131 = vpack.c.b16 %v2099, %v2095
        %v2132 = vpack.c.b16 %v2100, %v2096
        %2165 = vmatprep.subr.bf16.mxu0 %v2102
        %2166 = vmatpush1.bf16.xpose.msra.mxu0 %v2101
        %2167 = vmatprep.subr.bf16.mxu0 %v2106
        %2168 = vmatpush1.bf16.xpose.msra.mxu0 %v2105
        %2169 = vmatprep.subr.bf16.mxu0 %v2110
        %2170 = vmatpush1.bf16.xpose.msra.mxu0 %v2109
        %2171 = vmatprep.subr.bf16.mxu0 %v2114
        %2172 = vmatpush1.bf16.xpose.msra.mxu0 %v2113
        %2173 = vmatprep.subr.bf16.mxu0 %v2118
        %2174 = vmatpush1.bf16.xpose.msra.mxu0 %v2117
        %2175 = vmatprep.subr.bf16.mxu0 %v2122
        %2176 = vmatpush1.bf16.xpose.msra.mxu0 %v2121
        %2177 = vmatprep.subr.bf16.mxu0 %v2126
        %2178 = vmatpush1.bf16.xpose.msra.mxu0 %v2125
        %2179 = vmatprep.subr.bf16.mxu0 %v2130
        %2180 = vmatpush1.bf16.xpose.msra.mxu0 %v2129
        %2181 = vmatprep.subr.bf16.mxu0 0
        %2182 = vmatpush1.bf16.xpose.msra.mxu0 0
        %2183 = vmatprep.subr.bf16.mxu0 0
        %2184 = vmatpush1.bf16.xpose.msra.mxu0 0
        %2185 = vmatprep.subr.bf16.mxu0 0
        %2186 = vmatpush1.bf16.xpose.msra.mxu0 0
        %2187 = vmatprep.subr.bf16.mxu0 0
        %2188 = vmatpush1.bf16.xpose.msra.mxu0 0
        %2189 = vmatprep.subr.bf16.mxu0 0
        %2190 = vmatpush1.bf16.xpose.msra.mxu0 0
        %2191 = vmatprep.subr.bf16.mxu0 0
        %2192 = vmatpush1.bf16.xpose.msra.mxu0 0
        %2193 = vmatprep.subr.bf16.mxu0 0
        %2194 = vmatpush1.bf16.xpose.msra.mxu0 0
        %2195 = vmatprep.subr.bf16.mxu0 0
        %2196 = vmatpush1.bf16.xpose.msra.mxu0 0
        %2197 = vmatprep.mubr.bf16.mxu0 %v1963
        %2198 = vmatmul.mubr.bf16.gmra.mrb[0].mxu0 %v1962
        %v2199 = vpop.f32.mrb[0].mxu0
        %v2200 = vadd.f32 %v2003, %v2199
        %v2201 = vpop.f32.mrb[0].mxu0
        %v2202 = vpop.f32.mrb[0].mxu0
        %v2203 = vadd.f32 %v2003, %v2202
        %v2204 = vpop.f32.mrb[0].mxu0
        %2205 = vdwg.mxu0
        %2206 = vmatprep.subr.bf16.mxu0 %v2104
        %2207 = vmatpush1.bf16.xpose.msra.mxu0 %v2103
        %2208 = vmatprep.subr.bf16.mxu0 %v2108
        %2209 = vmatpush1.bf16.xpose.msra.mxu0 %v2107
        %2210 = vmatprep.subr.bf16.mxu0 %v2112
        %2211 = vmatpush1.bf16.xpose.msra.mxu0 %v2111
        %2212 = vmatprep.subr.bf16.mxu0 %v2116
        %2213 = vmatpush1.bf16.xpose.msra.mxu0 %v2115
        %2214 = vmatprep.subr.bf16.mxu0 %v2120
        %2215 = vmatpush1.bf16.xpose.msra.mxu0 %v2119
        %2216 = vmatprep.subr.bf16.mxu0 %v2124
        %2217 = vmatpush1.bf16.xpose.msra.mxu0 %v2123
        %2218 = vmatprep.subr.bf16.mxu0 %v2128
        %2219 = vmatpush1.bf16.xpose.msra.mxu0 %v2127
        %2220 = vmatprep.subr.bf16.mxu0 %v2132
        %2221 = vmatpush1.bf16.xpose.msra.mxu0 %v2131
        %2222 = vmatprep.subr.bf16.mxu0 0
        %2223 = vmatpush1.bf16.xpose.msra.mxu0 0
        %2224 = vmatprep.subr.bf16.mxu0 0
        %2225 = vmatpush1.bf16.xpose.msra.mxu0 0
        %2226 = vmatprep.subr.bf16.mxu0 0
        %2227 = vmatpush1.bf16.xpose.msra.mxu0 0
        %2228 = vmatprep.subr.bf16.mxu0 0
        %2229 = vmatpush1.bf16.xpose.msra.mxu0 0
        %2230 = vmatprep.subr.bf16.mxu0 0
        %2231 = vmatpush1.bf16.xpose.msra.mxu0 0
        %2232 = vmatprep.subr.bf16.mxu0 0
        %2233 = vmatpush1.bf16.xpose.msra.mxu0 0
        %2234 = vmatprep.subr.bf16.mxu0 0
        %2235 = vmatpush1.bf16.xpose.msra.mxu0 0
        %2236 = vmatprep.subr.bf16.mxu0 0
        %2237 = vmatpush1.bf16.xpose.msra.mxu0 0
        %2238 = vmatprep.mubr.bf16.mxu0 %v1965
        %2239 = vmatmul.mubr.bf16.gmra.mrb[0].mxu0 %v1964
        %v2240 = vpop.f32.mrb[0].mxu0
        %v2241 = vadd.f32 %v2200, %v2240
        %v2242 = vpop.f32.mrb[0].mxu0
        %v2243 = vpop.f32.mrb[0].mxu0
        %v2244 = vadd.f32 %v2203, %v2243
        %v2245 = vpop.f32.mrb[0].mxu0
        %2246 = vdwg.mxu0
        %v2247 = vadd.f32 %v1515, %v2241
        %v2248 = vadd.f32 %v1516, %v2244
        %2249 = vst [vmem:[%s541] sm:$0xff] %v2247
        %2250 = vst [vmem:[%s541 + $0x8] sm:$0xff] %v2248
        %s2251 = sand.u32 %s319, 1
        %s2252 = scalar_lea.sflag [#allocation5], %s2251
        %s2253 = sand.u32 %s319, 1
        %s2254 = smul.addr %s2253, 16
        %s2255 = scalar_lea.vmem [#allocation15], %s2254
        // Predicated region
        $region101: #{tpu_custom_call.1} parent=71 // pred_check
          %p2256 = pneg %p329
        $region102: #{tpu_custom_call.1} parent=71 // pred_check_branch
          %2258 = sbr.rel (%p2256) target = $region104
        $region103: #{tpu_custom_call.1} parent=71 // pred_region
          %s2260 = ssub.s32 256, 256
          %2261 = vsyncadd %s2252, %s2260
          %s2262 = smul.addr %s33, 2
          %s2263 = smul.addr %s2262, 128
          %s2264 = scalar_lea.hbm %s13, %s2263
          %s2265 = sshll.u32 %s2255, 4
          %s2266 = int_to_ptr.vmem [resolvable:$true] %s2265
          %2271 = dma.vmem_to_hbm [thread:$0]  %s2266, 256, %s2264, %s2252, 128, 128, 8
        $region104: #{tpu_custom_call.1} parent=71 // pred_fallthru
          _
      $region72: #{tpu_custom_call.1} parent=5 // pred_fallthru
        _
      %p2272 = scmp.le.s32.totalorder 2, %s28
      // Predicated region
      $region105: #{tpu_custom_call.1} parent=5 // pred_check
        %p2273 = pneg %p2272
      $region106: #{tpu_custom_call.1} parent=5 // pred_check_branch
        %2275 = sbr.rel (%p2273) target = $region108
      $region107: #{tpu_custom_call.1} parent=5 // pred_region
        %s2276 = ssub.s32 %s28, 2
        // Predicated region
        $region109: #{tpu_custom_call.1} parent=107 // pred_check
          %p2277 = pneg %p335
        $region110: #{tpu_custom_call.1} parent=107 // pred_check_branch
          %2279 = sbr.rel (%p2277) target = $region112
        $region111: #{tpu_custom_call.1} parent=107 // pred_region
          %s2280 = sand.u32 %s320, 1
          %s2281 = scalar_lea.sflag [#allocation5], %s2280
          %s2282 = sand.u32 %s320, 1
          %s2283 = smul.addr %s2282, 16
          %s2284 = scalar_lea.vmem [#allocation15], %s2283
          %2285 = dma.done %s2281, 256
        $region112: #{tpu_custom_call.1} parent=107 // pred_fallthru
          _
      $region108: #{tpu_custom_call.1} parent=5 // pred_fallthru
        _
    $region6: #{tpu_custom_call.1} parent=1 // loop_footer
      %s32 = sadd.s32 1, %s28
    $region7: #{tpu_custom_call.1} parent=1 // loop_footer_branch
      %27 = sbr.rel target = $region3
    $region8: #{tpu_custom_call.1} parent=1 // loop_exit
      _
    %2286 = vsyncpa [#allocation4], 1
    %s2287 = scalar_lea.sflag [#allocation4], 1
    %2288 = vsyncpa %s2287, 1
    %2289 = vsyncpa [#allocation7], 1
    %2290 = vsyncpa [#allocation10], 1
    %2291 = vsyncpa [#allocation13], 1
    %2292 = vsyncpa [#allocation5], 1
    %s2293 = scalar_lea.sflag [#allocation5], 1
    %2294 = vsyncpa %s2293, 1

</llo_original>
